<compile_context>
chip_gen: v5e
topology: v5e:2x2
jax: 0.10.0
libtpu: 0.0.40
codegen_flags: <defaults>
</compile_context>

<pallas_src>
import numpy as np
import jax
import jax.numpy as jnp
from jax import lax
from jax.experimental import pallas as pl
from jax.experimental.pallas import tpu as pltpu

# All operands are small at demo scale, so whole-array VMEM blocks in a single
# grid-less pallas_call are the right tiling choice here.
VMEM_SPEC = pl.BlockSpec(memory_space=pltpu.MemorySpace.VMEM)


# ------------------------------------------------------------------
# Single fused kernel: avg-pool -> LSTM -> MCB -> head
# ------------------------------------------------------------------
def make_fused_kernel(T, Bp, H, n_layers, d):
    n_in = 2 + 3 * n_layers + 5

    def kernel(*refs):
        img_ref = refs[0]                 # (Bp, HW, C)   f32
        ques_ref = refs[1]                # (T*Bp, E)     f32, time-major flattened
        lstm_refs = refs[2:2 + 3 * n_layers]
        a1_ref, a2_ref, p_ref, wp_ref, bp_ref = refs[2 + 3 * n_layers:n_in]
        out_ref = refs[n_in]              # (Bp, V_pad)   f32

        # ---- 1) global average pool over spatial positions: (Bp, HW, C) -> (Bp, C)
        img_vec = jnp.mean(img_ref[...], axis=1)

        # ---- 2) LSTM: fused gates, hoisted input projection, static unroll.
        x_flat = ques_ref[...]                                    # (T*Bp, E)
        h = None
        for l in range(n_layers):
            wih_ref, whh_ref, b_ref = lstm_refs[3 * l:3 * l + 3]

            # One big (T*Bp, E) @ (E, 4H) bf16 matmul + bias, OFF the serial path.
            xw = (jnp.dot(x_flat.astype(jnp.bfloat16), wih_ref[...],
                          preferred_element_type=jnp.float32)
                  + b_ref[...])                                   # (T*Bp, 4H) f32

            # Whh loaded once; the unrolled loop lets Mosaic keep the MXU RHS staged.
            whh = whh_ref[...]                                    # (H, 4H) f32

            h = jnp.zeros((Bp, H), jnp.float32)
            c = jnp.zeros((Bp, H), jnp.float32)
            hs = []
            for t in range(T):            # static unroll: whole recurrence visible
                # static, sublane-aligned slice of the hoisted projection (Bp = 8k)
                g = xw[t * Bp:(t + 1) * Bp, :] + jnp.dot(
                    h, whh, preferred_element_type=jnp.float32)   # (Bp, 4H)
                # 2 full-vreg transcendentals/step instead of 4 quarter-width ones
                sg = jax.nn.sigmoid(g)
                tg = jnp.tanh(g)
                c = sg[:, H:2 * H] * c + sg[:, 0:H] * tg[:, 2 * H:3 * H]
                h = sg[:, 3 * H:4 * H] * jnp.tanh(c)
                if l < n_layers - 1:
                    hs.append(h)
            if l < n_layers - 1:
                x_flat = jnp.concatenate(hs, axis=0)              # (T*Bp, H)

        ques_vec = h          # lstm_out[-1]; Dropout is identity at inference.

        # ---- 3) Compact Bilinear Pooling via the factored count-sketch in the
        #         DFT domain (exact), folded into 3 bf16 matmuls.
        xf = jnp.dot(img_vec.astype(jnp.bfloat16), a1_ref[...],
                     preferred_element_type=jnp.float32)          # (Bp, 2d): [Re | Im]
        yf = jnp.dot(ques_vec.astype(jnp.bfloat16), a2_ref[...],
                     preferred_element_type=jnp.float32)          # (Bp, 2d)
        xr, xi = xf[:, :d], xf[:, d:]
        yr, yi = yf[:, :d], yf[:, d:]
        w = jnp.concatenate([xr * yr - xi * yi, xr * yi + xi * yr], axis=1)  # (Bp, 2d)
        # P folds inverse-DFT, the (mcb_out, factor) sum-pool and the 1/d scale.
        iq_sum = jnp.dot(w.astype(jnp.bfloat16), p_ref[...],
                         preferred_element_type=jnp.float32)      # (Bp, mcb_out)

        # ---- 4) signed sqrt + L2 normalize (F.normalize, p=2, dim=1)
        iq_sqrt = jnp.where(iq_sum >= 0.0, 1.0, -1.0) * jnp.sqrt(jnp.abs(iq_sum))
        sq = jnp.sum(iq_sqrt * iq_sqrt, axis=1, keepdims=True)
        iq_norm = iq_sqrt * lax.rsqrt(jnp.maximum(sq, 1e-24))

        # ---- 5) Linear_predict + Softmax over the lane-padded vocab
        #         (pad-lane bias stays f32 at -1e9; accumulation in f32)
        logits = (jnp.dot(iq_norm.astype(jnp.bfloat16), wp_ref[...],
                          preferred_element_type=jnp.float32)
                  + bp_ref[...])
        m = jnp.max(logits, axis=1, keepdims=True)
        e = jnp.exp(logits - m)
        denom = jnp.sum(e, axis=1, keepdims=True)
        out_ref[...] = (e * pl.reciprocal(denom, approx=True)).astype(out_ref.dtype)

    return kernel


def mcb_baseline_forward(params, ques_embed, img_feat):
    B, Hh, Ww, C = img_feat.shape
    _, T, E = ques_embed.shape
    n_layers = len(params["wih"])
    H = params["whh"][0].shape[0]
    d = params["d"]
    Vp = params["w_pred_pad"].shape[1]

    # host-side layout glue only: pad rows to a multiple of 8 so every kernel
    # slice is (8,128)-tile aligned; NHWC -> (Bp, HW, C); (B,T,E) -> (T*Bp, E).
    Bp = ((B + 7) // 8) * 8
    img = jnp.pad(img_feat.reshape(B, Hh * Ww, C), ((0, Bp - B), (0, 0), (0, 0)))
    ques = jnp.pad(jnp.transpose(ques_embed, (1, 0, 2)),
                   ((0, 0), (0, Bp - B), (0, 0))).reshape(T * Bp, E)

    lstm_args = []
    for l in range(n_layers):
        lstm_args += [params["wih"][l], params["whh"][l], params["b_lstm"][l]]

    n_in = 2 + 3 * n_layers + 5
    kernel = make_fused_kernel(T, Bp, H, n_layers, d)
    out_pad = pl.pallas_call(
        kernel,
        out_shape=jax.ShapeDtypeStruct((Bp, Vp), jnp.float32),
        in_specs=[VMEM_SPEC] * n_in,
        out_specs=VMEM_SPEC,
        compiler_params=pltpu.CompilerParams(vmem_limit_bytes=32 * 1024 * 1024),
    )(img, ques, *lstm_args,
      params["a1"], params["a2"], params["p"],
      params["w_pred_pad"], params["b_pred_pad"])
    return out_pad[:B, :params["ans_vocab_size"]]


# ------------------------------------------------------------------
# Deterministic parameter / buffer construction (synthetic weights)
# ------------------------------------------------------------------
def init_params(key, *, embedding_size, LSTM_units, LSTM_layers, feat_size,
                ans_vocab_size, mcb_out, mcb_factor):
    d = mcb_out * mcb_factor
    k_lstm, k_sketch, k_lin = jax.random.split(key, 3)

    # LSTM weights stacked per gate (order i, f, g, o) into (E_in, 4H)/(H, 4H).
    # Wih is bf16 (large, off the serial path); Whh/bias stay f32 (serial path).
    wih_l, whh_l, b_l = [], [], []
    bound = 1.0 / np.sqrt(LSTM_units)
    in_size = embedding_size
    for _ in range(LSTM_layers):
        k_lstm, k1, k2, k3, k4 = jax.random.split(k_lstm, 5)
        wih = jax.random.uniform(k1, (in_size, 4 * LSTM_units), jnp.float32, -bound, bound)
        whh = jax.random.uniform(k2, (LSTM_units, 4 * LSTM_units), jnp.float32, -bound, bound)
        b_ih = jax.random.uniform(k3, (1, 4 * LSTM_units), jnp.float32, -bound, bound)
        b_hh = jax.random.uniform(k4, (1, 4 * LSTM_units), jnp.float32, -bound, bound)
        wih_l.append(wih.astype(jnp.bfloat16))
        whh_l.append(whh)
        b_l.append(b_ih + b_hh)
        in_size = LSTM_units

    # CompactBilinearPooling fixed random hashes / signs
    k_h1, k_s1, k_h2, k_s2 = jax.random.split(k_sketch, 4)
    h1 = np.asarray(jax.random.randint(k_h1, (feat_size,), 0, d), np.int64)
    s1 = np.asarray(jax.random.randint(k_s1, (feat_size,), 0, 2) * 2 - 1, np.float64)
    h2 = np.asarray(jax.random.randint(k_h2, (LSTM_units,), 0, d), np.int64)
    s2 = np.asarray(jax.random.randint(k_s2, (LSTM_units,), 0, 2) * 2 - 1, np.float64)

    # "count-sketch + forward DFT" folded into [cos | -sin] matrices (bf16).
    # Angles reduced mod d with exact integer arithmetic in f64 before the cast.
    k_idx = np.arange(d, dtype=np.int64)
    ang1 = 2.0 * np.pi * ((h1[:, None] * k_idx[None, :]) % d) / d           # (F, d)
    a1c = s1[:, None] * np.cos(ang1)
    a1s = s1[:, None] * np.sin(ang1)
    ang2 = 2.0 * np.pi * ((h2[:, None] * k_idx[None, :]) % d) / d           # (Hl, d)
    a2c = s2[:, None] * np.cos(ang2)
    a2s = s2[:, None] * np.sin(ang2)
    A1 = np.concatenate([a1c, -a1s], axis=1).astype(np.float32)             # (F, 2d)
    A2 = np.concatenate([a2c, -a2s], axis=1).astype(np.float32)             # (Hl, 2d)

    # inverse DFT fused with view(-1,1,mcb_out,factor).sum(3) and the 1/d scale
    angI = 2.0 * np.pi * ((k_idx[:, None] * k_idx[None, :]) % d) / d        # (d, d)
    cp = np.cos(angI).reshape(d, mcb_out, mcb_factor).sum(-1)
    sp = np.sin(angI).reshape(d, mcb_out, mcb_factor).sum(-1)
    P = (np.concatenate([cp, -sp], axis=0) / float(d)).astype(np.float32)   # (2d, mcb_out)

    # Linear_predict (the intended Linear(mcb_out, ans_vocab_size)); weight bf16,
    # bias (and the -1e9 pad bias) stay f32.
    lin_bound = 1.0 / np.sqrt(mcb_out)
    k_w, k_b = jax.random.split(k_lin)
    w_pred = jax.random.uniform(k_w, (mcb_out, ans_vocab_size), jnp.float32,
                                -lin_bound, lin_bound).astype(jnp.bfloat16)
    b_pred = jax.random.uniform(k_b, (1, ans_vocab_size), jnp.float32,
                                -lin_bound, lin_bound)

    v_pad = ((ans_vocab_size + 127) // 128) * 128
    w_pred_pad = jnp.zeros((mcb_out, v_pad), jnp.bfloat16).at[:, :ans_vocab_size].set(w_pred)
    b_pred_pad = jnp.full((1, v_pad), -1e9, jnp.float32).at[:, :ans_vocab_size].set(b_pred)

    return dict(
        wih=wih_l, whh=whh_l, b_lstm=b_l,
        a1=jnp.asarray(A1, jnp.bfloat16), a2=jnp.asarray(A2, jnp.bfloat16),
        p=jnp.asarray(P, jnp.bfloat16),
        w_pred=w_pred, b_pred=b_pred,
        w_pred_pad=w_pred_pad, b_pred_pad=b_pred_pad,
        h1=jnp.asarray(h1, jnp.int32), s1=jnp.asarray(s1, jnp.float32),
        h2=jnp.asarray(h2, jnp.int32), s2=jnp.asarray(s2, jnp.float32),
        mcb_out=mcb_out, mcb_factor=mcb_factor, ans_vocab_size=ans_vocab_size,
        d=d)


# ------------------------------------------------------------------
# Pure-JAX reference using the definitional dense count-sketch (sanity check)
# ------------------------------------------------------------------
def reference_forward(params, ques_embed, img_feat):
    HI = jax.lax.Precision.HIGHEST
    B, Hh, Ww, C = img_feat.shape
    img_vec = img_feat.reshape(B, Hh * Ww, C).mean(axis=1)

    x = jnp.transpose(ques_embed, (1, 0, 2))                    # (T, B, E)
    for wih, whh, b in zip(params["wih"], params["whh"], params["b_lstm"]):
        wih = wih.astype(jnp.float32)                           # same values as kernel
        T = x.shape[0]
        H = whh.shape[0]
        h = jnp.zeros((B, H), jnp.float32)
        c = jnp.zeros((B, H), jnp.float32)
        outs = []
        for t in range(T):
            g = (jnp.dot(x[t], wih, precision=HI)
                 + jnp.dot(h, whh, precision=HI) + b)
            i = jax.nn.sigmoid(g[:, 0:H]); f = jax.nn.sigmoid(g[:, H:2 * H])
            gg = jnp.tanh(g[:, 2 * H:3 * H]); o = jax.nn.sigmoid(g[:, 3 * H:4 * H])
            c = f * c + i * gg
            h = o * jnp.tanh(c)
            outs.append(h)
        x = jnp.stack(outs, 0)
    ques_vec = x[-1]

    # definitional compact bilinear pooling (count-sketch of the outer product)
    d = params["mcb_out"] * params["mcb_factor"]
    h1, s1, h2, s2 = params["h1"], params["s1"], params["h2"], params["s2"]
    idx = (h2[:, None] + h1[None, :]) % d                                   # (Hl, F)
    sketch = jax.nn.one_hot(idx, d, dtype=jnp.float32) * (s2[:, None, None] * s1[None, :, None])
    iq = jnp.einsum("bf,bh,hfd->bd", img_vec, ques_vec, sketch, precision=HI)
    iq_sum = iq.reshape(B, params["mcb_out"], params["mcb_factor"]).sum(-1)
    iq_sqrt = jnp.sqrt(jnp.maximum(iq_sum, 0.0)) - jnp.sqrt(jnp.maximum(-iq_sum, 0.0))
    norm = jnp.sqrt(jnp.sum(iq_sqrt * iq_sqrt, axis=1, keepdims=True))
    iq_norm = iq_sqrt / jnp.maximum(norm, 1e-12)
    logits = (jnp.dot(iq_norm, params["w_pred"].astype(jnp.float32), precision=HI)
              + params["b_pred"])
    return jax.nn.softmax(logits, axis=1)


if __name__ == "__main__":
    # Small shapes consistent with the module's forward
    embedding_size = 32
    LSTM_units = 32          # 4H = 128 -> lane-aligned fused gates
    LSTM_layers = 1
    feat_size = 64
    batch_size = 2           # padded to 8 rows inside the wrapper
    ans_vocab_size = 16      # padded to 128 lanes inside the kernel
    global_avg_pool_size = 4  # == H == W so AvgPool2d(k).squeeze() -> (B, feat_size)
    seq_len = 8
    # module hard-codes mcb_out=1000, mcb_factor=5 (d=5000); same structure,
    # scaled down and lane-aligned: mcb_out=128, factor=5, d=640.
    mcb_out, mcb_factor = 128, 5

    key = jax.random.PRNGKey(0)
    k_q, k_i, k_p = jax.random.split(key, 3)
    ques_embed = jax.random.normal(k_q, (batch_size, seq_len, embedding_size), jnp.float32)
    img_feat = jax.random.normal(
        k_i, (batch_size, global_avg_pool_size, global_avg_pool_size, feat_size),
        jnp.float32)

    params = init_params(
        k_p, embedding_size=embedding_size, LSTM_units=LSTM_units,
        LSTM_layers=LSTM_layers, feat_size=feat_size,
        ans_vocab_size=ans_vocab_size, mcb_out=mcb_out, mcb_factor=mcb_factor)

    pred = mcb_baseline_forward(params, ques_embed, img_feat)
    pred = jax.block_until_ready(pred)

    ref = reference_forward(params, ques_embed, img_feat)
    assert pred.shape == (batch_size, ans_vocab_size)
    assert bool(jnp.all(jnp.isfinite(pred)))
    err = float(jnp.max(jnp.abs(pred - ref)))
    assert err < 5e-3, err
    print("KERNEL_OK")
</pallas_src>

<mosaic_0001>
module attributes {stable_mosaic.version = 11 : i64} {
  func.func @kernel(%arg0: memref<8x16x64xf32, #tpu.memory_space<vmem>>, %arg1: memref<64x32xf32, #tpu.memory_space<vmem>>, %arg2: memref<32x128xbf16, #tpu.memory_space<vmem>>, %arg3: memref<32x128xf32, #tpu.memory_space<vmem>>, %arg4: memref<1x128xf32, #tpu.memory_space<vmem>>, %arg5: memref<64x1280xbf16, #tpu.memory_space<vmem>>, %arg6: memref<32x1280xbf16, #tpu.memory_space<vmem>>, %arg7: memref<1280x128xbf16, #tpu.memory_space<vmem>>, %arg8: memref<128x128xbf16, #tpu.memory_space<vmem>>, %arg9: memref<1x128xf32, #tpu.memory_space<vmem>>, %arg10: memref<8x128xf32, #tpu.memory_space<vmem>>) attributes {dimension_semantics = [], scalar_prefetch = 0 : i64, scratch_operands = 0 : i64, tpu.core_type = #tpu.core_type<tc>} {
    %c0 = arith.constant 0 : index
    %c0_0 = arith.constant 0 : index
    %c0_1 = arith.constant 0 : index
    %0 = vector.load %arg0[%c0, %c0_0, %c0_1] : memref<8x16x64xf32, #tpu.memory_space<vmem>>, vector<8x16x64xf32>
    %cst = arith.constant dense<0.000000e+00> : vector<8x64xf32>
    %1 = vector.multi_reduction <add>, %0, %cst [1] : vector<8x16x64xf32> to vector<8x64xf32>
    %cst_2 = arith.constant 1.600000e+01 : f32
    %2 = vector.broadcast %cst_2 : f32 to vector<8x64xf32>
    %3 = arith.divf %1, %2 : vector<8x64xf32>
    %c0_3 = arith.constant 0 : index
    %c0_4 = arith.constant 0 : index
    %4 = vector.load %arg1[%c0_3, %c0_4] : memref<64x32xf32, #tpu.memory_space<vmem>>, vector<64x32xf32>
    %5 = arith.truncf %4 : vector<64x32xf32> to vector<64x32xbf16>
    %c0_5 = arith.constant 0 : index
    %c0_6 = arith.constant 0 : index
    %6 = vector.load %arg2[%c0_5, %c0_6] : memref<32x128xbf16, #tpu.memory_space<vmem>>, vector<32x128xbf16>
    %cst_7 = arith.constant dense<0.000000e+00> : vector<64x128xf32>
    %7 = tpu.matmul %5, %6, %cst_7 {dimension_numbers = #tpu.dot_dimension_numbers<[1], [0], [0], [1], [0, 0, 1, 1], [], []>} : vector<64x32xbf16>, vector<32x128xbf16>, vector<64x128xf32> -> vector<64x128xf32>
    %c0_8 = arith.constant 0 : index
    %c0_9 = arith.constant 0 : index
    %8 = vector.load %arg4[%c0_8, %c0_9] : memref<1x128xf32, #tpu.memory_space<vmem>>, vector<1x128xf32>
    %9 = vector.broadcast %8 : vector<1x128xf32> to vector<64x128xf32>
    %10 = arith.addf %7, %9 : vector<64x128xf32>
    %c0_10 = arith.constant 0 : index
    %c0_11 = arith.constant 0 : index
    %11 = vector.load %arg3[%c0_10, %c0_11] : memref<32x128xf32, #tpu.memory_space<vmem>>, vector<32x128xf32>
    %cst_12 = arith.constant 0.000000e+00 : f32
    %12 = vector.broadcast %cst_12 : f32 to vector<8x32xf32>
    %cst_13 = arith.constant 0.000000e+00 : f32
    %13 = vector.broadcast %cst_13 : f32 to vector<8x32xf32>
    %14 = vector.extract_strided_slice %10 {offsets = [0, 0], sizes = [8, 128], strides = [1, 1]} : vector<64x128xf32> to vector<8x128xf32>
    %cst_14 = arith.constant dense<0.000000e+00> : vector<8x128xf32>
    %15 = tpu.matmul %12, %11, %cst_14 {dimension_numbers = #tpu.dot_dimension_numbers<[1], [0], [0], [1], [0, 0, 1, 1], [], []>} : vector<8x32xf32>, vector<32x128xf32>, vector<8x128xf32> -> vector<8x128xf32>
    %16 = arith.addf %14, %15 : vector<8x128xf32>
    %17 = arith.negf %16 : vector<8x128xf32>
    %18 = math.exp %17 : vector<8x128xf32>
    %cst_15 = arith.constant 1.000000e+00 : f32
    %19 = vector.broadcast %cst_15 : f32 to vector<8x128xf32>
    %20 = arith.addf %19, %18 : vector<8x128xf32>
    %21 = arith.divf %19, %20 : vector<8x128xf32>
    %22 = math.tanh %16 : vector<8x128xf32>
    %23 = vector.extract_strided_slice %21 {offsets = [0, 32], sizes = [8, 32], strides = [1, 1]} : vector<8x128xf32> to vector<8x32xf32>
    %24 = arith.mulf %23, %13 : vector<8x32xf32>
    %25 = vector.extract_strided_slice %21 {offsets = [0, 0], sizes = [8, 32], strides = [1, 1]} : vector<8x128xf32> to vector<8x32xf32>
    %26 = vector.extract_strided_slice %22 {offsets = [0, 64], sizes = [8, 32], strides = [1, 1]} : vector<8x128xf32> to vector<8x32xf32>
    %27 = arith.mulf %25, %26 : vector<8x32xf32>
    %28 = arith.addf %24, %27 : vector<8x32xf32>
    %29 = vector.extract_strided_slice %21 {offsets = [0, 96], sizes = [8, 32], strides = [1, 1]} : vector<8x128xf32> to vector<8x32xf32>
    %30 = math.tanh %28 : vector<8x32xf32>
    %31 = arith.mulf %29, %30 : vector<8x32xf32>
    %32 = vector.extract_strided_slice %10 {offsets = [8, 0], sizes = [8, 128], strides = [1, 1]} : vector<64x128xf32> to vector<8x128xf32>
    %cst_16 = arith.constant dense<0.000000e+00> : vector<8x128xf32>
    %33 = tpu.matmul %31, %11, %cst_16 {dimension_numbers = #tpu.dot_dimension_numbers<[1], [0], [0], [1], [0, 0, 1, 1], [], []>} : vector<8x32xf32>, vector<32x128xf32>, vector<8x128xf32> -> vector<8x128xf32>
    %34 = arith.addf %32, %33 : vector<8x128xf32>
    %35 = arith.negf %34 : vector<8x128xf32>
    %36 = math.exp %35 : vector<8x128xf32>
    %cst_17 = arith.constant 1.000000e+00 : f32
    %37 = vector.broadcast %cst_17 : f32 to vector<8x128xf32>
    %38 = arith.addf %37, %36 : vector<8x128xf32>
    %39 = arith.divf %37, %38 : vector<8x128xf32>
    %40 = math.tanh %34 : vector<8x128xf32>
    %41 = vector.extract_strided_slice %39 {offsets = [0, 32], sizes = [8, 32], strides = [1, 1]} : vector<8x128xf32> to vector<8x32xf32>
    %42 = arith.mulf %41, %28 : vector<8x32xf32>
    %43 = vector.extract_strided_slice %39 {offsets = [0, 0], sizes = [8, 32], strides = [1, 1]} : vector<8x128xf32> to vector<8x32xf32>
    %44 = vector.extract_strided_slice %40 {offsets = [0, 64], sizes = [8, 32], strides = [1, 1]} : vector<8x128xf32> to vector<8x32xf32>
    %45 = arith.mulf %43, %44 : vector<8x32xf32>
    %46 = arith.addf %42, %45 : vector<8x32xf32>
    %47 = vector.extract_strided_slice %39 {offsets = [0, 96], sizes = [8, 32], strides = [1, 1]} : vector<8x128xf32> to vector<8x32xf32>
    %48 = math.tanh %46 : vector<8x32xf32>
    %49 = arith.mulf %47, %48 : vector<8x32xf32>
    %50 = vector.extract_strided_slice %10 {offsets = [16, 0], sizes = [8, 128], strides = [1, 1]} : vector<64x128xf32> to vector<8x128xf32>
    %cst_18 = arith.constant dense<0.000000e+00> : vector<8x128xf32>
    %51 = tpu.matmul %49, %11, %cst_18 {dimension_numbers = #tpu.dot_dimension_numbers<[1], [0], [0], [1], [0, 0, 1, 1], [], []>} : vector<8x32xf32>, vector<32x128xf32>, vector<8x128xf32> -> vector<8x128xf32>
    %52 = arith.addf %50, %51 : vector<8x128xf32>
    %53 = arith.negf %52 : vector<8x128xf32>
    %54 = math.exp %53 : vector<8x128xf32>
    %cst_19 = arith.constant 1.000000e+00 : f32
    %55 = vector.broadcast %cst_19 : f32 to vector<8x128xf32>
    %56 = arith.addf %55, %54 : vector<8x128xf32>
    %57 = arith.divf %55, %56 : vector<8x128xf32>
    %58 = math.tanh %52 : vector<8x128xf32>
    %59 = vector.extract_strided_slice %57 {offsets = [0, 32], sizes = [8, 32], strides = [1, 1]} : vector<8x128xf32> to vector<8x32xf32>
    %60 = arith.mulf %59, %46 : vector<8x32xf32>
    %61 = vector.extract_strided_slice %57 {offsets = [0, 0], sizes = [8, 32], strides = [1, 1]} : vector<8x128xf32> to vector<8x32xf32>
    %62 = vector.extract_strided_slice %58 {offsets = [0, 64], sizes = [8, 32], strides = [1, 1]} : vector<8x128xf32> to vector<8x32xf32>
    %63 = arith.mulf %61, %62 : vector<8x32xf32>
    %64 = arith.addf %60, %63 : vector<8x32xf32>
    %65 = vector.extract_strided_slice %57 {offsets = [0, 96], sizes = [8, 32], strides = [1, 1]} : vector<8x128xf32> to vector<8x32xf32>
    %66 = math.tanh %64 : vector<8x32xf32>
    %67 = arith.mulf %65, %66 : vector<8x32xf32>
    %68 = vector.extract_strided_slice %10 {offsets = [24, 0], sizes = [8, 128], strides = [1, 1]} : vector<64x128xf32> to vector<8x128xf32>
    %cst_20 = arith.constant dense<0.000000e+00> : vector<8x128xf32>
    %69 = tpu.matmul %67, %11, %cst_20 {dimension_numbers = #tpu.dot_dimension_numbers<[1], [0], [0], [1], [0, 0, 1, 1], [], []>} : vector<8x32xf32>, vector<32x128xf32>, vector<8x128xf32> -> vector<8x128xf32>
    %70 = arith.addf %68, %69 : vector<8x128xf32>
    %71 = arith.negf %70 : vector<8x128xf32>
    %72 = math.exp %71 : vector<8x128xf32>
    %cst_21 = arith.constant 1.000000e+00 : f32
    %73 = vector.broadcast %cst_21 : f32 to vector<8x128xf32>
    %74 = arith.addf %73, %72 : vector<8x128xf32>
    %75 = arith.divf %73, %74 : vector<8x128xf32>
    %76 = math.tanh %70 : vector<8x128xf32>
    %77 = vector.extract_strided_slice %75 {offsets = [0, 32], sizes = [8, 32], strides = [1, 1]} : vector<8x128xf32> to vector<8x32xf32>
    %78 = arith.mulf %77, %64 : vector<8x32xf32>
    %79 = vector.extract_strided_slice %75 {offsets = [0, 0], sizes = [8, 32], strides = [1, 1]} : vector<8x128xf32> to vector<8x32xf32>
    %80 = vector.extract_strided_slice %76 {offsets = [0, 64], sizes = [8, 32], strides = [1, 1]} : vector<8x128xf32> to vector<8x32xf32>
    %81 = arith.mulf %79, %80 : vector<8x32xf32>
    %82 = arith.addf %78, %81 : vector<8x32xf32>
    %83 = vector.extract_strided_slice %75 {offsets = [0, 96], sizes = [8, 32], strides = [1, 1]} : vector<8x128xf32> to vector<8x32xf32>
    %84 = math.tanh %82 : vector<8x32xf32>
    %85 = arith.mulf %83, %84 : vector<8x32xf32>
    %86 = vector.extract_strided_slice %10 {offsets = [32, 0], sizes = [8, 128], strides = [1, 1]} : vector<64x128xf32> to vector<8x128xf32>
    %cst_22 = arith.constant dense<0.000000e+00> : vector<8x128xf32>
    %87 = tpu.matmul %85, %11, %cst_22 {dimension_numbers = #tpu.dot_dimension_numbers<[1], [0], [0], [1], [0, 0, 1, 1], [], []>} : vector<8x32xf32>, vector<32x128xf32>, vector<8x128xf32> -> vector<8x128xf32>
    %88 = arith.addf %86, %87 : vector<8x128xf32>
    %89 = arith.negf %88 : vector<8x128xf32>
    %90 = math.exp %89 : vector<8x128xf32>
    %cst_23 = arith.constant 1.000000e+00 : f32
    %91 = vector.broadcast %cst_23 : f32 to vector<8x128xf32>
    %92 = arith.addf %91, %90 : vector<8x128xf32>
    %93 = arith.divf %91, %92 : vector<8x128xf32>
    %94 = math.tanh %88 : vector<8x128xf32>
    %95 = vector.extract_strided_slice %93 {offsets = [0, 32], sizes = [8, 32], strides = [1, 1]} : vector<8x128xf32> to vector<8x32xf32>
    %96 = arith.mulf %95, %82 : vector<8x32xf32>
    %97 = vector.extract_strided_slice %93 {offsets = [0, 0], sizes = [8, 32], strides = [1, 1]} : vector<8x128xf32> to vector<8x32xf32>
    %98 = vector.extract_strided_slice %94 {offsets = [0, 64], sizes = [8, 32], strides = [1, 1]} : vector<8x128xf32> to vector<8x32xf32>
    %99 = arith.mulf %97, %98 : vector<8x32xf32>
    %100 = arith.addf %96, %99 : vector<8x32xf32>
    %101 = vector.extract_strided_slice %93 {offsets = [0, 96], sizes = [8, 32], strides = [1, 1]} : vector<8x128xf32> to vector<8x32xf32>
    %102 = math.tanh %100 : vector<8x32xf32>
    %103 = arith.mulf %101, %102 : vector<8x32xf32>
    %104 = vector.extract_strided_slice %10 {offsets = [40, 0], sizes = [8, 128], strides = [1, 1]} : vector<64x128xf32> to vector<8x128xf32>
    %cst_24 = arith.constant dense<0.000000e+00> : vector<8x128xf32>
    %105 = tpu.matmul %103, %11, %cst_24 {dimension_numbers = #tpu.dot_dimension_numbers<[1], [0], [0], [1], [0, 0, 1, 1], [], []>} : vector<8x32xf32>, vector<32x128xf32>, vector<8x128xf32> -> vector<8x128xf32>
    %106 = arith.addf %104, %105 : vector<8x128xf32>
    %107 = arith.negf %106 : vector<8x128xf32>
    %108 = math.exp %107 : vector<8x128xf32>
    %cst_25 = arith.constant 1.000000e+00 : f32
    %109 = vector.broadcast %cst_25 : f32 to vector<8x128xf32>
    %110 = arith.addf %109, %108 : vector<8x128xf32>
    %111 = arith.divf %109, %110 : vector<8x128xf32>
    %112 = math.tanh %106 : vector<8x128xf32>
    %113 = vector.extract_strided_slice %111 {offsets = [0, 32], sizes = [8, 32], strides = [1, 1]} : vector<8x128xf32> to vector<8x32xf32>
    %114 = arith.mulf %113, %100 : vector<8x32xf32>
    %115 = vector.extract_strided_slice %111 {offsets = [0, 0], sizes = [8, 32], strides = [1, 1]} : vector<8x128xf32> to vector<8x32xf32>
    %116 = vector.extract_strided_slice %112 {offsets = [0, 64], sizes = [8, 32], strides = [1, 1]} : vector<8x128xf32> to vector<8x32xf32>
    %117 = arith.mulf %115, %116 : vector<8x32xf32>
    %118 = arith.addf %114, %117 : vector<8x32xf32>
    %119 = vector.extract_strided_slice %111 {offsets = [0, 96], sizes = [8, 32], strides = [1, 1]} : vector<8x128xf32> to vector<8x32xf32>
    %120 = math.tanh %118 : vector<8x32xf32>
    %121 = arith.mulf %119, %120 : vector<8x32xf32>
    %122 = vector.extract_strided_slice %10 {offsets = [48, 0], sizes = [8, 128], strides = [1, 1]} : vector<64x128xf32> to vector<8x128xf32>
    %cst_26 = arith.constant dense<0.000000e+00> : vector<8x128xf32>
    %123 = tpu.matmul %121, %11, %cst_26 {dimension_numbers = #tpu.dot_dimension_numbers<[1], [0], [0], [1], [0, 0, 1, 1], [], []>} : vector<8x32xf32>, vector<32x128xf32>, vector<8x128xf32> -> vector<8x128xf32>
    %124 = arith.addf %122, %123 : vector<8x128xf32>
    %125 = arith.negf %124 : vector<8x128xf32>
    %126 = math.exp %125 : vector<8x128xf32>
    %cst_27 = arith.constant 1.000000e+00 : f32
    %127 = vector.broadcast %cst_27 : f32 to vector<8x128xf32>
    %128 = arith.addf %127, %126 : vector<8x128xf32>
    %129 = arith.divf %127, %128 : vector<8x128xf32>
    %130 = math.tanh %124 : vector<8x128xf32>
    %131 = vector.extract_strided_slice %129 {offsets = [0, 32], sizes = [8, 32], strides = [1, 1]} : vector<8x128xf32> to vector<8x32xf32>
    %132 = arith.mulf %131, %118 : vector<8x32xf32>
    %133 = vector.extract_strided_slice %129 {offsets = [0, 0], sizes = [8, 32], strides = [1, 1]} : vector<8x128xf32> to vector<8x32xf32>
    %134 = vector.extract_strided_slice %130 {offsets = [0, 64], sizes = [8, 32], strides = [1, 1]} : vector<8x128xf32> to vector<8x32xf32>
    %135 = arith.mulf %133, %134 : vector<8x32xf32>
    %136 = arith.addf %132, %135 : vector<8x32xf32>
    %137 = vector.extract_strided_slice %129 {offsets = [0, 96], sizes = [8, 32], strides = [1, 1]} : vector<8x128xf32> to vector<8x32xf32>
    %138 = math.tanh %136 : vector<8x32xf32>
    %139 = arith.mulf %137, %138 : vector<8x32xf32>
    %140 = vector.extract_strided_slice %10 {offsets = [56, 0], sizes = [8, 128], strides = [1, 1]} : vector<64x128xf32> to vector<8x128xf32>
    %cst_28 = arith.constant dense<0.000000e+00> : vector<8x128xf32>
    %141 = tpu.matmul %139, %11, %cst_28 {dimension_numbers = #tpu.dot_dimension_numbers<[1], [0], [0], [1], [0, 0, 1, 1], [], []>} : vector<8x32xf32>, vector<32x128xf32>, vector<8x128xf32> -> vector<8x128xf32>
    %142 = arith.addf %140, %141 : vector<8x128xf32>
    %143 = arith.negf %142 : vector<8x128xf32>
    %144 = math.exp %143 : vector<8x128xf32>
    %cst_29 = arith.constant 1.000000e+00 : f32
    %145 = vector.broadcast %cst_29 : f32 to vector<8x128xf32>
    %146 = arith.addf %145, %144 : vector<8x128xf32>
    %147 = arith.divf %145, %146 : vector<8x128xf32>
    %148 = math.tanh %142 : vector<8x128xf32>
    %149 = vector.extract_strided_slice %147 {offsets = [0, 32], sizes = [8, 32], strides = [1, 1]} : vector<8x128xf32> to vector<8x32xf32>
    %150 = arith.mulf %149, %136 : vector<8x32xf32>
    %151 = vector.extract_strided_slice %147 {offsets = [0, 0], sizes = [8, 32], strides = [1, 1]} : vector<8x128xf32> to vector<8x32xf32>
    %152 = vector.extract_strided_slice %148 {offsets = [0, 64], sizes = [8, 32], strides = [1, 1]} : vector<8x128xf32> to vector<8x32xf32>
    %153 = arith.mulf %151, %152 : vector<8x32xf32>
    %154 = arith.addf %150, %153 : vector<8x32xf32>
    %155 = vector.extract_strided_slice %147 {offsets = [0, 96], sizes = [8, 32], strides = [1, 1]} : vector<8x128xf32> to vector<8x32xf32>
    %156 = math.tanh %154 : vector<8x32xf32>
    %157 = arith.mulf %155, %156 : vector<8x32xf32>
    %158 = arith.truncf %3 : vector<8x64xf32> to vector<8x64xbf16>
    %c0_30 = arith.constant 0 : index
    %c0_31 = arith.constant 0 : index
    %159 = vector.load %arg5[%c0_30, %c0_31] : memref<64x1280xbf16, #tpu.memory_space<vmem>>, vector<64x1280xbf16>
    %cst_32 = arith.constant dense<0.000000e+00> : vector<8x1280xf32>
    %160 = tpu.matmul %158, %159, %cst_32 {dimension_numbers = #tpu.dot_dimension_numbers<[1], [0], [0], [1], [0, 0, 1, 1], [], []>} : vector<8x64xbf16>, vector<64x1280xbf16>, vector<8x1280xf32> -> vector<8x1280xf32>
    %161 = arith.truncf %157 : vector<8x32xf32> to vector<8x32xbf16>
    %c0_33 = arith.constant 0 : index
    %c0_34 = arith.constant 0 : index
    %162 = vector.load %arg6[%c0_33, %c0_34] : memref<32x1280xbf16, #tpu.memory_space<vmem>>, vector<32x1280xbf16>
    %cst_35 = arith.constant dense<0.000000e+00> : vector<8x1280xf32>
    %163 = tpu.matmul %161, %162, %cst_35 {dimension_numbers = #tpu.dot_dimension_numbers<[1], [0], [0], [1], [0, 0, 1, 1], [], []>} : vector<8x32xbf16>, vector<32x1280xbf16>, vector<8x1280xf32> -> vector<8x1280xf32>
    %164 = vector.extract_strided_slice %160 {offsets = [0, 0], sizes = [8, 640], strides = [1, 1]} : vector<8x1280xf32> to vector<8x640xf32>
    %165 = vector.extract_strided_slice %160 {offsets = [0, 640], sizes = [8, 640], strides = [1, 1]} : vector<8x1280xf32> to vector<8x640xf32>
    %166 = vector.extract_strided_slice %163 {offsets = [0, 0], sizes = [8, 640], strides = [1, 1]} : vector<8x1280xf32> to vector<8x640xf32>
    %167 = vector.extract_strided_slice %163 {offsets = [0, 640], sizes = [8, 640], strides = [1, 1]} : vector<8x1280xf32> to vector<8x640xf32>
    %168 = arith.mulf %164, %166 : vector<8x640xf32>
    %169 = arith.mulf %165, %167 : vector<8x640xf32>
    %170 = arith.subf %168, %169 : vector<8x640xf32>
    %171 = arith.mulf %164, %167 : vector<8x640xf32>
    %172 = arith.mulf %165, %166 : vector<8x640xf32>
    %173 = arith.addf %171, %172 : vector<8x640xf32>
    %174 = tpu.concatenate %170, %173 in 1 : vector<8x640xf32>, vector<8x640xf32> -> vector<8x1280xf32>
    %175 = arith.truncf %174 : vector<8x1280xf32> to vector<8x1280xbf16>
    %c0_36 = arith.constant 0 : index
    %c0_37 = arith.constant 0 : index
    %176 = vector.load %arg7[%c0_36, %c0_37] : memref<1280x128xbf16, #tpu.memory_space<vmem>>, vector<1280x128xbf16>
    %cst_38 = arith.constant dense<0.000000e+00> : vector<8x128xf32>
    %177 = tpu.matmul %175, %176, %cst_38 {dimension_numbers = #tpu.dot_dimension_numbers<[1], [0], [0], [1], [0, 0, 1, 1], [], []>} : vector<8x1280xbf16>, vector<1280x128xbf16>, vector<8x128xf32> -> vector<8x128xf32>
    %cst_39 = arith.constant 0.000000e+00 : f32
    %178 = vector.broadcast %cst_39 : f32 to vector<8x128xf32>
    %179 = arith.cmpf oge, %177, %178 : vector<8x128xf32>
    %cst_40 = arith.constant 1.000000e+00 : f32
    %cst_41 = arith.constant -1.000000e+00 : f32
    %180 = vector.broadcast %cst_40 : f32 to vector<8x128xf32>
    %181 = vector.broadcast %cst_41 : f32 to vector<8x128xf32>
    %182 = arith.select %179, %180, %181 : vector<8x128xi1>, vector<8x128xf32>
    %183 = math.absf %177 : vector<8x128xf32>
    %184 = math.sqrt %183 : vector<8x128xf32>
    %185 = arith.mulf %182, %184 : vector<8x128xf32>
    %186 = arith.mulf %185, %185 : vector<8x128xf32>
    %cst_42 = arith.constant dense<0.000000e+00> : vector<8xf32>
    %187 = vector.multi_reduction <add>, %186, %cst_42 [1] : vector<8x128xf32> to vector<8xf32>
    %188 = vector.shape_cast %187 : vector<8xf32> to vector<8x1xf32>
    %cst_43 = arith.constant 1.000000e-24 : f32
    %189 = vector.broadcast %cst_43 : f32 to vector<8x1xf32>
    %190 = arith.maximumf %188, %189 : vector<8x1xf32>
    %191 = math.rsqrt %190 : vector<8x1xf32>
    %192 = vector.broadcast %191 : vector<8x1xf32> to vector<8x128xf32>
    %193 = arith.mulf %185, %192 : vector<8x128xf32>
    %194 = arith.truncf %193 : vector<8x128xf32> to vector<8x128xbf16>
    %c0_44 = arith.constant 0 : index
    %c0_45 = arith.constant 0 : index
    %195 = vector.load %arg8[%c0_44, %c0_45] : memref<128x128xbf16, #tpu.memory_space<vmem>>, vector<128x128xbf16>
    %cst_46 = arith.constant dense<0.000000e+00> : vector<8x128xf32>
    %196 = tpu.matmul %194, %195, %cst_46 {dimension_numbers = #tpu.dot_dimension_numbers<[1], [0], [0], [1], [0, 0, 1, 1], [], []>} : vector<8x128xbf16>, vector<128x128xbf16>, vector<8x128xf32> -> vector<8x128xf32>
    %c0_47 = arith.constant 0 : index
    %c0_48 = arith.constant 0 : index
    %197 = vector.load %arg9[%c0_47, %c0_48] : memref<1x128xf32, #tpu.memory_space<vmem>>, vector<1x128xf32>
    %198 = vector.broadcast %197 : vector<1x128xf32> to vector<8x128xf32>
    %199 = arith.addf %196, %198 : vector<8x128xf32>
    %cst_49 = arith.constant dense<0xFF800000> : vector<8xf32>
    %200 = vector.multi_reduction <maximumf>, %199, %cst_49 [1] : vector<8x128xf32> to vector<8xf32>
    %201 = vector.shape_cast %200 : vector<8xf32> to vector<8x1xf32>
    %202 = vector.broadcast %201 : vector<8x1xf32> to vector<8x128xf32>
    %203 = arith.subf %199, %202 : vector<8x128xf32>
    %204 = math.exp %203 : vector<8x128xf32>
    %cst_50 = arith.constant dense<0.000000e+00> : vector<8xf32>
    %205 = vector.multi_reduction <add>, %204, %cst_50 [1] : vector<8x128xf32> to vector<8xf32>
    %206 = vector.shape_cast %205 : vector<8xf32> to vector<8x1xf32>
    %207 = tpu.reciprocal %206 {approx = true} : vector<8x1xf32> -> vector<8x1xf32>
    %208 = vector.broadcast %207 : vector<8x1xf32> to vector<8x128xf32>
    %209 = arith.mulf %204, %208 : vector<8x128xf32>
    %c0_51 = arith.constant 0 : index
    %c0_52 = arith.constant 0 : index
    %210 = vector.load %arg10[%c0_51, %c0_52] : memref<8x128xf32, #tpu.memory_space<vmem>>, vector<8x128xf32>
    tpu.vector_store %arg10[%c0_51, %c0_52], %209 {strides = array<i32>} : memref<8x128xf32, #tpu.memory_space<vmem>>, vector<8x128xf32>,
    return
  }
}

</mosaic_0001>

<llo_original>
// kernel: tpu_custom_call.1
$region0: #{tpu_custom_call.1}
  #allocation0 [shape = 'u32[]', space=smem, size = 0x4, offset = 0x4, fixed_abs, tag = 'smem constant byte address 0x4 - core index']
  #allocation1 [shape = 'u32[72,128]{1,0:T(1,128)}', space=vmem, size = 0x9000, scoped, tag = 'internal scratch']
  %s0 = inlined_call_operand.hbm [shape: f32[8,16,64], index: 0, kind: input, shape index: {}]
  %s1 = inlined_call_operand.vmem [shape: f32[64,32], index: 1, kind: input, shape index: {}]
  %s2 = inlined_call_operand.hbm [shape: bf16[32,128], index: 2, kind: input, shape index: {}]
  %s3 = inlined_call_operand.vmem [shape: f32[32,128], index: 3, kind: input, shape index: {}]
  %s4 = inlined_call_operand.vmem [shape: f32[1,128], index: 4, kind: input, shape index: {}]
  %s5 = inlined_call_operand.hbm [shape: bf16[64,1280], index: 5, kind: input, shape index: {}]
  %s6 = inlined_call_operand.hbm [shape: bf16[32,1280], index: 6, kind: input, shape index: {}]
  %s7 = inlined_call_operand.hbm [shape: bf16[1280,128], index: 7, kind: input, shape index: {}]
  %s8 = inlined_call_operand.vmem [shape: bf16[128,128], index: 8, kind: input, shape index: {}]
  %s9 = inlined_call_operand.vmem [shape: f32[1,128], index: 9, kind: input, shape index: {}]
  %s10 = inlined_call_operand.hbm [shape: f32[8,128], index: 10, kind: output, shape index: {}]
  %s11 = sld [smem:[#allocation0]]
  $region70: #{tpu_custom_call.1} parent=0
    _
  %s13 = ssub.s32 1, %s11
  %s14 = scalar_select 0, %s13, %s11
  $region1: #{tpu_custom_call.1} parent=0
    #allocation2 [shape = 'u8[65536]{0}', space=vmem, size = 0x10000, scoped, tag = 'input window, operand 0, single buffered']
    #allocation3 [shape = 's32[1]{0}', space=sflag, size = 0x4, scoped, tag = 'scoped memory for tpu_custom_call.1']
    #allocation4 [shape = 's32[1]{0}', space=sflag, size = 0x4, scoped, tag = 'scoped memory for tpu_custom_call.1']
    #allocation5 [shape = 'u8[8192]{0}', space=vmem, size = 0x2000, scoped, tag = 'input window, operand 2, single buffered']
    #allocation6 [shape = 's32[1]{0}', space=sflag, size = 0x4, scoped, tag = 'scoped memory for tpu_custom_call.1']
    #allocation7 [shape = 'u8[163840]{0}', space=vmem, size = 0x28000, scoped, tag = 'input window, operand 5, single buffered']
    #allocation8 [shape = 'u8[81920]{0}', space=vmem, size = 0x14000, scoped, tag = 'input window, operand 6, single buffered']
    #allocation9 [shape = 's32[1]{0}', space=sflag, size = 0x4, scoped, tag = 'scoped memory for tpu_custom_call.1']
    #allocation10 [shape = 'u8[327680]{0}', space=vmem, size = 0x50000, scoped, tag = 'input window, operand 7, single buffered']
    #allocation11 [shape = 'u8[4096]{0}', space=vmem, size = 0x1000, scoped, tag = 'output window, operand 0, single buffered']
    %15 = vsyncpa [#allocation3], 0
    %16 = vsyncpa [#allocation6], 0
    %17 = vsyncpa [#allocation9], 0
    %18 = vsyncpa [#allocation4], 0
    // Predicated region
    $region2: #{tpu_custom_call.1} parent=1 // pred_check
      _
    $region3: #{tpu_custom_call.1} parent=1 // pred_check_branch
      %20 = sbr.rel (0) target = $region5
    $region4: #{tpu_custom_call.1} parent=1 // pred_region
      %22 = vsyncadd [#allocation3], 0
      %s23 = sshll.u32 %s0, 4
      %s24 = int_to_ptr.hbm [resolvable:$true] %s23
      %s25 = sshll.u32 [#allocation2], 4
      %s26 = int_to_ptr.vmem [resolvable:$true] %s25
      %31 = dma.hbm_to_vmem [thread:$0]  %s24, 2048, %s26, [#allocation3], 128, 128, 8
    $region5: #{tpu_custom_call.1} parent=1 // pred_fallthru
      _
    // Predicated region
    $region6: #{tpu_custom_call.1} parent=1 // pred_check
      _
    $region7: #{tpu_custom_call.1} parent=1 // pred_check_branch
      %33 = sbr.rel (0) target = $region9
    $region8: #{tpu_custom_call.1} parent=1 // pred_region
      _
    $region9: #{tpu_custom_call.1} parent=1 // pred_fallthru
      _
    // Predicated region
    $region10: #{tpu_custom_call.1} parent=1 // pred_check
      _
    $region11: #{tpu_custom_call.1} parent=1 // pred_check_branch
      %35 = sbr.rel (0) target = $region13
    $region12: #{tpu_custom_call.1} parent=1 // pred_region
      %37 = vsyncadd [#allocation6], 0
      %s38 = sshll.u32 %s2, 4
      %s39 = int_to_ptr.hbm [resolvable:$true] %s38
      %s40 = sshll.u32 [#allocation5], 4
      %s41 = int_to_ptr.vmem [resolvable:$true] %s40
      %46 = dma.hbm_to_vmem [thread:$0]  %s39, 256, %s41, [#allocation6], 64, 64, 4
    $region13: #{tpu_custom_call.1} parent=1 // pred_fallthru
      _
    // Predicated region
    $region14: #{tpu_custom_call.1} parent=1 // pred_check
      _
    $region15: #{tpu_custom_call.1} parent=1 // pred_check_branch
      %48 = sbr.rel (0) target = $region17
    $region16: #{tpu_custom_call.1} parent=1 // pred_region
      _
    $region17: #{tpu_custom_call.1} parent=1 // pred_fallthru
      _
    // Predicated region
    $region18: #{tpu_custom_call.1} parent=1 // pred_check
      _
    $region19: #{tpu_custom_call.1} parent=1 // pred_check_branch
      %50 = sbr.rel (0) target = $region21
    $region20: #{tpu_custom_call.1} parent=1 // pred_region
      _
    $region21: #{tpu_custom_call.1} parent=1 // pred_fallthru
      _
    // Predicated region
    $region22: #{tpu_custom_call.1} parent=1 // pred_check
      _
    $region23: #{tpu_custom_call.1} parent=1 // pred_check_branch
      %52 = sbr.rel (0) target = $region25
    $region24: #{tpu_custom_call.1} parent=1 // pred_region
      %54 = vsyncadd [#allocation6], 0
      %s55 = sshll.u32 %s5, 4
      %s56 = int_to_ptr.hbm [resolvable:$true] %s55
      %s57 = sshll.u32 [#allocation7], 4
      %s58 = int_to_ptr.vmem [resolvable:$true] %s57
      %63 = dma.hbm_to_vmem [thread:$0]  %s56, 5120, %s58, [#allocation6], 640, 640, 40
    $region25: #{tpu_custom_call.1} parent=1 // pred_fallthru
      _
    // Predicated region
    $region26: #{tpu_custom_call.1} parent=1 // pred_check
      _
    $region27: #{tpu_custom_call.1} parent=1 // pred_check_branch
      %65 = sbr.rel (0) target = $region29
    $region28: #{tpu_custom_call.1} parent=1 // pred_region
      %67 = vsyncadd [#allocation9], 0
      %s68 = sshll.u32 %s6, 4
      %s69 = int_to_ptr.hbm [resolvable:$true] %s68
      %s70 = sshll.u32 [#allocation8], 4
      %s71 = int_to_ptr.vmem [resolvable:$true] %s70
      %76 = dma.hbm_to_vmem [thread:$0]  %s69, 2560, %s71, [#allocation9], 640, 640, 40
    $region29: #{tpu_custom_call.1} parent=1 // pred_fallthru
      _
    // Predicated region
    $region30: #{tpu_custom_call.1} parent=1 // pred_check
      _
    $region31: #{tpu_custom_call.1} parent=1 // pred_check_branch
      %78 = sbr.rel (0) target = $region33
    $region32: #{tpu_custom_call.1} parent=1 // pred_region
      %80 = vsyncadd [#allocation9], 0
      %s81 = sshll.u32 %s7, 4
      %s82 = int_to_ptr.hbm [resolvable:$true] %s81
      %s83 = sshll.u32 [#allocation10], 4
      %s84 = int_to_ptr.vmem [resolvable:$true] %s83
      %89 = dma.hbm_to_vmem [thread:$0]  %s82, 10240, %s84, [#allocation9], 64, 64, 4
    $region33: #{tpu_custom_call.1} parent=1 // pred_fallthru
      _
    // Predicated region
    $region34: #{tpu_custom_call.1} parent=1 // pred_check
      _
    $region35: #{tpu_custom_call.1} parent=1 // pred_check_branch
      %91 = sbr.rel (0) target = $region37
    $region36: #{tpu_custom_call.1} parent=1 // pred_region
      _
    $region37: #{tpu_custom_call.1} parent=1 // pred_fallthru
      _
    // Predicated region
    $region38: #{tpu_custom_call.1} parent=1 // pred_check
      _
    $region39: #{tpu_custom_call.1} parent=1 // pred_check_branch
      %93 = sbr.rel (0) target = $region41
    $region40: #{tpu_custom_call.1} parent=1 // pred_region
      _
    $region41: #{tpu_custom_call.1} parent=1 // pred_fallthru
      _
    // Predicated region
    $region42: #{tpu_custom_call.1} parent=1 // pred_check
      _
    $region43: #{tpu_custom_call.1} parent=1 // pred_check_branch
      %95 = sbr.rel (0) target = $region45
    $region44: #{tpu_custom_call.1} parent=1 // pred_region
      %97 = dma.done [#allocation3], 2048
    $region45: #{tpu_custom_call.1} parent=1 // pred_fallthru
      _
    // Predicated region
    $region46: #{tpu_custom_call.1} parent=1 // pred_check
      _
    $region47: #{tpu_custom_call.1} parent=1 // pred_check_branch
      %99 = sbr.rel (0) target = $region49
    $region48: #{tpu_custom_call.1} parent=1 // pred_region
      %101 = dma.done [#allocation6], 256
    $region49: #{tpu_custom_call.1} parent=1 // pred_fallthru
      _
    // Predicated region
    $region50: #{tpu_custom_call.1} parent=1 // pred_check
      _
    $region51: #{tpu_custom_call.1} parent=1 // pred_check_branch
      %103 = sbr.rel (0) target = $region53
    $region52: #{tpu_custom_call.1} parent=1 // pred_region
      %105 = dma.done [#allocation6], 5120
    $region53: #{tpu_custom_call.1} parent=1 // pred_fallthru
      _
    // Predicated region
    $region54: #{tpu_custom_call.1} parent=1 // pred_check
      _
    $region55: #{tpu_custom_call.1} parent=1 // pred_check_branch
      %107 = sbr.rel (0) target = $region57
    $region56: #{tpu_custom_call.1} parent=1 // pred_region
      %109 = dma.done [#allocation9], 2560
    $region57: #{tpu_custom_call.1} parent=1 // pred_fallthru
      _
    // Predicated region
    $region58: #{tpu_custom_call.1} parent=1 // pred_check
      _
    $region59: #{tpu_custom_call.1} parent=1 // pred_check_branch
      %111 = sbr.rel (0) target = $region61
    $region60: #{tpu_custom_call.1} parent=1 // pred_region
      %113 = dma.done [#allocation9], 10240
    $region61: #{tpu_custom_call.1} parent=1 // pred_fallthru
      _
    %v115 = vld [vmem:[#allocation2] sm:$0xff]
    %v116 = vld [vmem:[#allocation2 + $0x8] sm:$0xff]
    %v117 = vld [vmem:[#allocation2 + $0x10] sm:$0xff]
    %v118 = vld [vmem:[#allocation2 + $0x18] sm:$0xff]
    %v119 = vld [vmem:[#allocation2 + $0x20] sm:$0xff]
    %v120 = vld [vmem:[#allocation2 + $0x28] sm:$0xff]
    %v121 = vld [vmem:[#allocation2 + $0x30] sm:$0xff]
    %v122 = vld [vmem:[#allocation2 + $0x38] sm:$0xff]
    %v123 = vld [vmem:[#allocation2 + $0x40] sm:$0xff]
    %v124 = vld [vmem:[#allocation2 + $0x48] sm:$0xff]
    %v125 = vld [vmem:[#allocation2 + $0x50] sm:$0xff]
    %v126 = vld [vmem:[#allocation2 + $0x58] sm:$0xff]
    %v127 = vld [vmem:[#allocation2 + $0x60] sm:$0xff]
    %v128 = vld [vmem:[#allocation2 + $0x68] sm:$0xff]
    %v129 = vld [vmem:[#allocation2 + $0x70] sm:$0xff]
    %v130 = vld [vmem:[#allocation2 + $0x78] sm:$0xff]
    %vm131 = vcmask 523264
    %v132 = vsel %vm131, %v115, 0.0
    %v133 = vsel %vm131, %v116, 0.0
    %v134 = vadd.f32 %v132, %v133
    %v135 = vrot.slane %v134, 4
    %v136 = vadd.f32 %v134, %v135
    %v137 = vrot.slane %v136, 2
    %v138 = vadd.f32 %v136, %v137
    %v139 = vrot.slane %v138, 1
    %v140 = vadd.f32 %v138, %v139
    %v141 = vsel %vm131, %v117, 0.0
    %v142 = vsel %vm131, %v118, 0.0
    %v143 = vadd.f32 %v141, %v142
    %v144 = vrot.slane %v143, 4
    %v145 = vadd.f32 %v143, %v144
    %v146 = vrot.slane %v145, 2
    %v147 = vadd.f32 %v145, %v146
    %v148 = vrot.slane %v147, 1
    %v149 = vadd.f32 %v147, %v148
    %v150 = vsel %vm131, %v119, 0.0
    %v151 = vsel %vm131, %v120, 0.0
    %v152 = vadd.f32 %v150, %v151
    %v153 = vrot.slane %v152, 4
    %v154 = vadd.f32 %v152, %v153
    %v155 = vrot.slane %v154, 2
    %v156 = vadd.f32 %v154, %v155
    %v157 = vrot.slane %v156, 1
    %v158 = vadd.f32 %v156, %v157
    %v159 = vsel %vm131, %v121, 0.0
    %v160 = vsel %vm131, %v122, 0.0
    %v161 = vadd.f32 %v159, %v160
    %v162 = vrot.slane %v161, 4
    %v163 = vadd.f32 %v161, %v162
    %v164 = vrot.slane %v163, 2
    %v165 = vadd.f32 %v163, %v164
    %v166 = vrot.slane %v165, 1
    %v167 = vadd.f32 %v165, %v166
    %v168 = vsel %vm131, %v123, 0.0
    %v169 = vsel %vm131, %v124, 0.0
    %v170 = vadd.f32 %v168, %v169
    %v171 = vrot.slane %v170, 4
    %v172 = vadd.f32 %v170, %v171
    %v173 = vrot.slane %v172, 2
    %v174 = vadd.f32 %v172, %v173
    %v175 = vrot.slane %v174, 1
    %v176 = vadd.f32 %v174, %v175
    %v177 = vsel %vm131, %v125, 0.0
    %v178 = vsel %vm131, %v126, 0.0
    %v179 = vadd.f32 %v177, %v178
    %v180 = vrot.slane %v179, 4
    %v181 = vadd.f32 %v179, %v180
    %v182 = vrot.slane %v181, 2
    %v183 = vadd.f32 %v181, %v182
    %v184 = vrot.slane %v183, 1
    %v185 = vadd.f32 %v183, %v184
    %v186 = vsel %vm131, %v127, 0.0
    %v187 = vsel %vm131, %v128, 0.0
    %v188 = vadd.f32 %v186, %v187
    %v189 = vrot.slane %v188, 4
    %v190 = vadd.f32 %v188, %v189
    %v191 = vrot.slane %v190, 2
    %v192 = vadd.f32 %v190, %v191
    %v193 = vrot.slane %v192, 1
    %v194 = vadd.f32 %v192, %v193
    %v195 = vsel %vm131, %v129, 0.0
    %v196 = vsel %vm131, %v130, 0.0
    %v197 = vadd.f32 %v195, %v196
    %v198 = vrot.slane %v197, 4
    %v199 = vadd.f32 %v197, %v198
    %v200 = vrot.slane %v199, 2
    %v201 = vadd.f32 %v199, %v200
    %v202 = vrot.slane %v201, 1
    %v203 = vadd.f32 %v201, %v202
    %v204 = vrcp.pop 16.0
    %v205 = vmul.f32 16.0, %v204
    %v206 = vsub.f32 1.0, %v205
    %v207 = vmul.f32 %v204, %v206
    %v208 = vadd.f32 %v204, %v207
    %vm209 = vweird.f32 %v204
    %v210 = vsel %vm209, %v204, %v208
    %v211 = vmul.f32 %v140, %v210
    %v212 = vmul.f32 %v149, %v210
    %v213 = vmul.f32 %v158, %v210
    %v214 = vmul.f32 %v167, %v210
    %v215 = vmul.f32 %v176, %v210
    %v216 = vmul.f32 %v185, %v210
    %v217 = vmul.f32 %v194, %v210
    %v218 = vmul.f32 %v203, %v210
    %v219 = vld [vmem:[%s1] sm:$0xff]
    %v220 = vld [vmem:[%s1 + $0x8] sm:$0xff]
    %v221 = vld [vmem:[%s1 + $0x10] sm:$0xff]
    %v222 = vld [vmem:[%s1 + $0x18] sm:$0xff]
    %v223 = vld [vmem:[%s1 + $0x20] sm:$0xff]
    %v224 = vld [vmem:[%s1 + $0x28] sm:$0xff]
    %v225 = vld [vmem:[%s1 + $0x30] sm:$0xff]
    %v226 = vld [vmem:[%s1 + $0x38] sm:$0xff]
    %v227 = vpack.c.bf16 %v220, %v219
    %v228 = vpack.c.bf16 %v222, %v221
    %v229 = vpack.c.bf16 %v224, %v223
    %v230 = vpack.c.bf16 %v226, %v225
    %v231 = vld [vmem:[#allocation5] sm:$0xf]
    %v232 = vld [vmem:[#allocation5 + $0x4] sm:$0xf]
    %v233 = vld [vmem:[#allocation5 + $0x8] sm:$0xf]
    %v234 = vld [vmem:[#allocation5 + $0xc] sm:$0xf]
    %v235 = vld [vmem:[%s4] sm:$0x1]
    %v237 = vperm.slane %v235, 0
    %v243 = vunpack.c.l.b16 %v231
    %v244 = vunpack.c.l.b16 %v232
    %v245 = vunpack.c.l.b16 %v233
    %v246 = vunpack.c.l.b16 %v234
    %v247 = vpack.c.b16 %v244, %v243
    %v248 = vpack.c.b16 %v246, %v245
    %vm251 = vcmask 261120
    %v253 = vsel %vm251, %v227, 0
    %v256 = vsel %vm251, %v228, 0
    %v259 = vsel %vm251, %v229, 0
    %v262 = vsel %vm251, %v230, 0
    %264 = vmatpush.bf16.msra.mxu0 0
    %265 = vmatpush.bf16.msra.mxu0 0
    %266 = vmatpush.bf16.msra.mxu0 0
    %267 = vmatpush.bf16.msra.mxu0 0
    %268 = vmatpush.bf16.msra.mxu0 0
    %269 = vmatpush.bf16.msra.mxu0 0
    %270 = vmatpush.bf16.msra.mxu0 %v248
    %271 = vmatpush.bf16.msra.mxu0 %v247
    %272 = vmatmul.bf16.gmra.mxu0 %v253
    %v273 = vpop.f32.mrf.mxu0
    %v274 = vadd.f32 %v237, %v273
    %v275 = vpop.f32.mrf.mxu0
    %v276 = vadd.f32 %v237, %v275
    %277 = vmatmul.bf16.gmra.mxu0 %v256
    %v278 = vpop.f32.mrf.mxu0
    %v279 = vadd.f32 %v237, %v278
    %v280 = vpop.f32.mrf.mxu0
    %v281 = vadd.f32 %v237, %v280
    %282 = vmatmul.bf16.gmra.mxu0 %v259
    %v283 = vpop.f32.mrf.mxu0
    %v284 = vadd.f32 %v237, %v283
    %v285 = vpop.f32.mrf.mxu0
    %v286 = vadd.f32 %v237, %v285
    %287 = vmatmul.bf16.gmra.mxu0 %v262
    %v288 = vpop.f32.mrf.mxu0
    %v289 = vadd.f32 %v237, %v288
    %v290 = vpop.f32.mrf.mxu0
    %v291 = vadd.f32 %v237, %v290
    %292 = vdwg.mxu0
    %v293 = vld [vmem:[%s3] sm:$0xff]
    %v294 = vld [vmem:[%s3 + $0x8] sm:$0xff]
    %v295 = vld [vmem:[%s3 + $0x10] sm:$0xff]
    %v296 = vld [vmem:[%s3 + $0x18] sm:$0xff]
    %v298 = vsel %vm251, 0.0, 0
    %300 = vmatpush.msra.mxu0 0.0
    %301 = vmatpush.msra.mxu0 0.0
    %302 = vmatpush.msra.mxu0 0.0
    %303 = vmatpush.msra.mxu0 0.0
    %304 = vmatpush.msra.mxu0 0.0
    %305 = vmatpush.msra.mxu0 0.0
    %306 = vmatpush.msra.mxu0 0.0
    %307 = vmatpush.msra.mxu0 0.0
    %308 = vmatpush.msra.mxu0 0.0
    %309 = vmatpush.msra.mxu0 0.0
    %310 = vmatpush.msra.mxu0 0.0
    %311 = vmatpush.msra.mxu0 0.0
    %312 = vmatpush.msra.mxu0 %v296
    %313 = vmatpush.msra.mxu0 %v295
    %314 = vmatpush.msra.mxu0 %v294
    %315 = vmatpush.msra.mxu0 %v293
    %316 = vmatmul.f32.gmra.mxu0 %v298
    %v317 = vpop.f32.mrf.mxu0
    %v318 = vadd.f32 0.0, %v317
    %319 = vdwg.mxu0
    %v320 = vadd.f32 %v274, %v318
    %v321 = vxor.u32 %v320, 2147483648
    %v322 = vmul.f32 %v321, 1.442695
    %v323 = vpow.pop %v322
    %v324 = vadd.f32 %v323, 1.0
    %v325 = vrcp.pop %v324
    %v326 = vmul.f32 %v324, %v325
    %v327 = vsub.f32 1.0, %v326
    %v328 = vmul.f32 %v325, %v327
    %v329 = vadd.f32 %v325, %v328
    %vm330 = vweird.f32 %v324
    %vm331 = vweird.f32 %v325
    %vm332 = vmor %vm330, %vm331
    %v333 = vsel %vm332, %v325, %v329
    %v334 = vand.u32 2147483647, %v324
    %vm335 = vcmp.eq.f32.partialorder %v334, 8.507059e+37
    %v336 = vand.u32 %v324, 2147483648
    %v337 = vor.u32 1.1754944e-38, %v336
    %v338 = vsel %vm335, %v337, %v333
    %v339 = vmul.f32 1.0, %v338
    %v340 = vtanh.pop %v320
    %v341 = vmul.f32 %v339, 0.0
    %343 = vrot.lane.b32.xlu0 %v340, 64
    %v344 = vpop.permute.xlu0 %343
    %v346 = vmul.f32 %v339, %v344
    %348 = vrot.lane.b32.xlu0 %v346, 32
    %v349 = vpop.permute.xlu0 %348
    %v351 = vadd.f32 %v341, %v349
    %v352 = vtanh.pop %v351
    %354 = vrot.lane.b32.xlu0 %v352, 64
    %v355 = vpop.permute.xlu0 %354
    %v357 = vmul.f32 %v339, %v355
    %359 = vrot.lane.b32.xlu0 %v357, 32
    %v360 = vpop.permute.xlu0 %359
    %v361 = vsel %vm251, %v360, 0
    %363 = vmatpush.msra.mxu0 0.0
    %364 = vmatpush.msra.mxu0 0.0
    %365 = vmatpush.msra.mxu0 0.0
    %366 = vmatpush.msra.mxu0 0.0
    %367 = vmatpush.msra.mxu0 0.0
    %368 = vmatpush.msra.mxu0 0.0
    %369 = vmatpush.msra.mxu0 0.0
    %370 = vmatpush.msra.mxu0 0.0
    %371 = vmatpush.msra.mxu0 0.0
    %372 = vmatpush.msra.mxu0 0.0
    %373 = vmatpush.msra.mxu0 0.0
    %374 = vmatpush.msra.mxu0 0.0
    %375 = vmatpush.msra.mxu0 %v296
    %376 = vmatpush.msra.mxu0 %v295
    %377 = vmatpush.msra.mxu0 %v294
    %378 = vmatpush.msra.mxu0 %v293
    %379 = vmatmul.f32.gmra.mxu0 %v361
    %v380 = vpop.f32.mrf.mxu0
    %v381 = vadd.f32 0.0, %v380
    %382 = vdwg.mxu0
    %v383 = vadd.f32 %v276, %v381
    %v384 = vxor.u32 %v383, 2147483648
    %v385 = vmul.f32 %v384, 1.442695
    %v386 = vpow.pop %v385
    %v387 = vadd.f32 %v386, 1.0
    %v388 = vrcp.pop %v387
    %v389 = vmul.f32 %v387, %v388
    %v390 = vsub.f32 1.0, %v389
    %v391 = vmul.f32 %v388, %v390
    %v392 = vadd.f32 %v388, %v391
    %vm393 = vweird.f32 %v387
    %vm394 = vweird.f32 %v388
    %vm395 = vmor %vm393, %vm394
    %v396 = vsel %vm395, %v388, %v392
    %v397 = vand.u32 2147483647, %v387
    %vm398 = vcmp.eq.f32.partialorder %v397, 8.507059e+37
    %v399 = vand.u32 %v387, 2147483648
    %v400 = vor.u32 1.1754944e-38, %v399
    %v401 = vsel %vm398, %v400, %v396
    %v402 = vmul.f32 1.0, %v401
    %v403 = vtanh.pop %v383
    %v404 = vmul.f32 %v402, %v351
    %406 = vrot.lane.b32.xlu0 %v403, 64
    %v407 = vpop.permute.xlu0 %406
    %v409 = vmul.f32 %v402, %v407
    %411 = vrot.lane.b32.xlu0 %v409, 32
    %v412 = vpop.permute.xlu0 %411
    %v414 = vadd.f32 %v404, %v412
    %v415 = vtanh.pop %v414
    %417 = vrot.lane.b32.xlu0 %v415, 64
    %v418 = vpop.permute.xlu0 %417
    %v420 = vmul.f32 %v402, %v418
    %422 = vrot.lane.b32.xlu0 %v420, 32
    %v423 = vpop.permute.xlu0 %422
    %v424 = vsel %vm251, %v423, 0
    %426 = vmatpush.msra.mxu0 0.0
    %427 = vmatpush.msra.mxu0 0.0
    %428 = vmatpush.msra.mxu0 0.0
    %429 = vmatpush.msra.mxu0 0.0
    %430 = vmatpush.msra.mxu0 0.0
    %431 = vmatpush.msra.mxu0 0.0
    %432 = vmatpush.msra.mxu0 0.0
    %433 = vmatpush.msra.mxu0 0.0
    %434 = vmatpush.msra.mxu0 0.0
    %435 = vmatpush.msra.mxu0 0.0
    %436 = vmatpush.msra.mxu0 0.0
    %437 = vmatpush.msra.mxu0 0.0
    %438 = vmatpush.msra.mxu0 %v296
    %439 = vmatpush.msra.mxu0 %v295
    %440 = vmatpush.msra.mxu0 %v294
    %441 = vmatpush.msra.mxu0 %v293
    %442 = vmatmul.f32.gmra.mxu0 %v424
    %v443 = vpop.f32.mrf.mxu0
    %v444 = vadd.f32 0.0, %v443
    %445 = vdwg.mxu0
    %v446 = vadd.f32 %v279, %v444
    %v447 = vxor.u32 %v446, 2147483648
    %v448 = vmul.f32 %v447, 1.442695
    %v449 = vpow.pop %v448
    %v450 = vadd.f32 %v449, 1.0
    %v451 = vrcp.pop %v450
    %v452 = vmul.f32 %v450, %v451
    %v453 = vsub.f32 1.0, %v452
    %v454 = vmul.f32 %v451, %v453
    %v455 = vadd.f32 %v451, %v454
    %vm456 = vweird.f32 %v450
    %vm457 = vweird.f32 %v451
    %vm458 = vmor %vm456, %vm457
    %v459 = vsel %vm458, %v451, %v455
    %v460 = vand.u32 2147483647, %v450
    %vm461 = vcmp.eq.f32.partialorder %v460, 8.507059e+37
    %v462 = vand.u32 %v450, 2147483648
    %v463 = vor.u32 1.1754944e-38, %v462
    %v464 = vsel %vm461, %v463, %v459
    %v465 = vmul.f32 1.0, %v464
    %v466 = vtanh.pop %v446
    %v467 = vmul.f32 %v465, %v414
    %469 = vrot.lane.b32.xlu0 %v466, 64
    %v470 = vpop.permute.xlu0 %469
    %v472 = vmul.f32 %v465, %v470
    %474 = vrot.lane.b32.xlu0 %v472, 32
    %v475 = vpop.permute.xlu0 %474
    %v477 = vadd.f32 %v467, %v475
    %v478 = vtanh.pop %v477
    %480 = vrot.lane.b32.xlu0 %v478, 64
    %v481 = vpop.permute.xlu0 %480
    %v483 = vmul.f32 %v465, %v481
    %485 = vrot.lane.b32.xlu0 %v483, 32
    %v486 = vpop.permute.xlu0 %485
    %v487 = vsel %vm251, %v486, 0
    %489 = vmatpush.msra.mxu0 0.0
    %490 = vmatpush.msra.mxu0 0.0
    %491 = vmatpush.msra.mxu0 0.0
    %492 = vmatpush.msra.mxu0 0.0
    %493 = vmatpush.msra.mxu0 0.0
    %494 = vmatpush.msra.mxu0 0.0
    %495 = vmatpush.msra.mxu0 0.0
    %496 = vmatpush.msra.mxu0 0.0
    %497 = vmatpush.msra.mxu0 0.0
    %498 = vmatpush.msra.mxu0 0.0
    %499 = vmatpush.msra.mxu0 0.0
    %500 = vmatpush.msra.mxu0 0.0
    %501 = vmatpush.msra.mxu0 %v296
    %502 = vmatpush.msra.mxu0 %v295
    %503 = vmatpush.msra.mxu0 %v294
    %504 = vmatpush.msra.mxu0 %v293
    %505 = vmatmul.f32.gmra.mxu0 %v487
    %v506 = vpop.f32.mrf.mxu0
    %v507 = vadd.f32 0.0, %v506
    %508 = vdwg.mxu0
    %v509 = vadd.f32 %v281, %v507
    %v510 = vxor.u32 %v509, 2147483648
    %v511 = vmul.f32 %v510, 1.442695
    %v512 = vpow.pop %v511
    %v513 = vadd.f32 %v512, 1.0
    %v514 = vrcp.pop %v513
    %v515 = vmul.f32 %v513, %v514
    %v516 = vsub.f32 1.0, %v515
    %v517 = vmul.f32 %v514, %v516
    %v518 = vadd.f32 %v514, %v517
    %vm519 = vweird.f32 %v513
    %vm520 = vweird.f32 %v514
    %vm521 = vmor %vm519, %vm520
    %v522 = vsel %vm521, %v514, %v518
    %v523 = vand.u32 2147483647, %v513
    %vm524 = vcmp.eq.f32.partialorder %v523, 8.507059e+37
    %v525 = vand.u32 %v513, 2147483648
    %v526 = vor.u32 1.1754944e-38, %v525
    %v527 = vsel %vm524, %v526, %v522
    %v528 = vmul.f32 1.0, %v527
    %v529 = vtanh.pop %v509
    %v530 = vmul.f32 %v528, %v477
    %532 = vrot.lane.b32.xlu0 %v529, 64
    %v533 = vpop.permute.xlu0 %532
    %v535 = vmul.f32 %v528, %v533
    %537 = vrot.lane.b32.xlu0 %v535, 32
    %v538 = vpop.permute.xlu0 %537
    %v540 = vadd.f32 %v530, %v538
    %v541 = vtanh.pop %v540
    %543 = vrot.lane.b32.xlu0 %v541, 64
    %v544 = vpop.permute.xlu0 %543
    %v546 = vmul.f32 %v528, %v544
    %548 = vrot.lane.b32.xlu0 %v546, 32
    %v549 = vpop.permute.xlu0 %548
    %v550 = vsel %vm251, %v549, 0
    %552 = vmatpush.msra.mxu0 0.0
    %553 = vmatpush.msra.mxu0 0.0
    %554 = vmatpush.msra.mxu0 0.0
    %555 = vmatpush.msra.mxu0 0.0
    %556 = vmatpush.msra.mxu0 0.0
    %557 = vmatpush.msra.mxu0 0.0
    %558 = vmatpush.msra.mxu0 0.0
    %559 = vmatpush.msra.mxu0 0.0
    %560 = vmatpush.msra.mxu0 0.0
    %561 = vmatpush.msra.mxu0 0.0
    %562 = vmatpush.msra.mxu0 0.0
    %563 = vmatpush.msra.mxu0 0.0
    %564 = vmatpush.msra.mxu0 %v296
    %565 = vmatpush.msra.mxu0 %v295
    %566 = vmatpush.msra.mxu0 %v294
    %567 = vmatpush.msra.mxu0 %v293
    %568 = vmatmul.f32.gmra.mxu0 %v550
    %v569 = vpop.f32.mrf.mxu0
    %v570 = vadd.f32 0.0, %v569
    %571 = vdwg.mxu0
    %v572 = vadd.f32 %v284, %v570
    %v573 = vxor.u32 %v572, 2147483648
    %v574 = vmul.f32 %v573, 1.442695
    %v575 = vpow.pop %v574
    %v576 = vadd.f32 %v575, 1.0
    %v577 = vrcp.pop %v576
    %v578 = vmul.f32 %v576, %v577
    %v579 = vsub.f32 1.0, %v578
    %v580 = vmul.f32 %v577, %v579
    %v581 = vadd.f32 %v577, %v580
    %vm582 = vweird.f32 %v576
    %vm583 = vweird.f32 %v577
    %vm584 = vmor %vm582, %vm583
    %v585 = vsel %vm584, %v577, %v581
    %v586 = vand.u32 2147483647, %v576
    %vm587 = vcmp.eq.f32.partialorder %v586, 8.507059e+37
    %v588 = vand.u32 %v576, 2147483648
    %v589 = vor.u32 1.1754944e-38, %v588
    %v590 = vsel %vm587, %v589, %v585
    %v591 = vmul.f32 1.0, %v590
    %v592 = vtanh.pop %v572
    %v593 = vmul.f32 %v591, %v540
    %595 = vrot.lane.b32.xlu0 %v592, 64
    %v596 = vpop.permute.xlu0 %595
    %v598 = vmul.f32 %v591, %v596
    %600 = vrot.lane.b32.xlu0 %v598, 32
    %v601 = vpop.permute.xlu0 %600
    %v603 = vadd.f32 %v593, %v601
    %v604 = vtanh.pop %v603
    %606 = vrot.lane.b32.xlu0 %v604, 64
    %v607 = vpop.permute.xlu0 %606
    %v609 = vmul.f32 %v591, %v607
    %611 = vrot.lane.b32.xlu0 %v609, 32
    %v612 = vpop.permute.xlu0 %611
    %v613 = vsel %vm251, %v612, 0
    %615 = vmatpush.msra.mxu0 0.0
    %616 = vmatpush.msra.mxu0 0.0
    %617 = vmatpush.msra.mxu0 0.0
    %618 = vmatpush.msra.mxu0 0.0
    %619 = vmatpush.msra.mxu0 0.0
    %620 = vmatpush.msra.mxu0 0.0
    %621 = vmatpush.msra.mxu0 0.0
    %622 = vmatpush.msra.mxu0 0.0
    %623 = vmatpush.msra.mxu0 0.0
    %624 = vmatpush.msra.mxu0 0.0
    %625 = vmatpush.msra.mxu0 0.0
    %626 = vmatpush.msra.mxu0 0.0
    %627 = vmatpush.msra.mxu0 %v296
    %628 = vmatpush.msra.mxu0 %v295
    %629 = vmatpush.msra.mxu0 %v294
    %630 = vmatpush.msra.mxu0 %v293
    %631 = vmatmul.f32.gmra.mxu0 %v613
    %v632 = vpop.f32.mrf.mxu0
    %v633 = vadd.f32 0.0, %v632
    %634 = vdwg.mxu0
    %v635 = vadd.f32 %v286, %v633
    %v636 = vxor.u32 %v635, 2147483648
    %v637 = vmul.f32 %v636, 1.442695
    %v638 = vpow.pop %v637
    %v639 = vadd.f32 %v638, 1.0
    %v640 = vrcp.pop %v639
    %v641 = vmul.f32 %v639, %v640
    %v642 = vsub.f32 1.0, %v641
    %v643 = vmul.f32 %v640, %v642
    %v644 = vadd.f32 %v640, %v643
    %vm645 = vweird.f32 %v639
    %vm646 = vweird.f32 %v640
    %vm647 = vmor %vm645, %vm646
    %v648 = vsel %vm647, %v640, %v644
    %v649 = vand.u32 2147483647, %v639
    %vm650 = vcmp.eq.f32.partialorder %v649, 8.507059e+37
    %v651 = vand.u32 %v639, 2147483648
    %v652 = vor.u32 1.1754944e-38, %v651
    %v653 = vsel %vm650, %v652, %v648
    %v654 = vmul.f32 1.0, %v653
    %v655 = vtanh.pop %v635
    %v656 = vmul.f32 %v654, %v603
    %658 = vrot.lane.b32.xlu0 %v655, 64
    %v659 = vpop.permute.xlu0 %658
    %v661 = vmul.f32 %v654, %v659
    %663 = vrot.lane.b32.xlu0 %v661, 32
    %v664 = vpop.permute.xlu0 %663
    %v666 = vadd.f32 %v656, %v664
    %v667 = vtanh.pop %v666
    %669 = vrot.lane.b32.xlu0 %v667, 64
    %v670 = vpop.permute.xlu0 %669
    %v672 = vmul.f32 %v654, %v670
    %674 = vrot.lane.b32.xlu0 %v672, 32
    %v675 = vpop.permute.xlu0 %674
    %v676 = vsel %vm251, %v675, 0
    %678 = vmatpush.msra.mxu0 0.0
    %679 = vmatpush.msra.mxu0 0.0
    %680 = vmatpush.msra.mxu0 0.0
    %681 = vmatpush.msra.mxu0 0.0
    %682 = vmatpush.msra.mxu0 0.0
    %683 = vmatpush.msra.mxu0 0.0
    %684 = vmatpush.msra.mxu0 0.0
    %685 = vmatpush.msra.mxu0 0.0
    %686 = vmatpush.msra.mxu0 0.0
    %687 = vmatpush.msra.mxu0 0.0
    %688 = vmatpush.msra.mxu0 0.0
    %689 = vmatpush.msra.mxu0 0.0
    %690 = vmatpush.msra.mxu0 %v296
    %691 = vmatpush.msra.mxu0 %v295
    %692 = vmatpush.msra.mxu0 %v294
    %693 = vmatpush.msra.mxu0 %v293
    %694 = vmatmul.f32.gmra.mxu0 %v676
    %v695 = vpop.f32.mrf.mxu0
    %v696 = vadd.f32 0.0, %v695
    %697 = vdwg.mxu0
    %v698 = vadd.f32 %v289, %v696
    %v699 = vxor.u32 %v698, 2147483648
    %v700 = vmul.f32 %v699, 1.442695
    %v701 = vpow.pop %v700
    %v702 = vadd.f32 %v701, 1.0
    %v703 = vrcp.pop %v702
    %v704 = vmul.f32 %v702, %v703
    %v705 = vsub.f32 1.0, %v704
    %v706 = vmul.f32 %v703, %v705
    %v707 = vadd.f32 %v703, %v706
    %vm708 = vweird.f32 %v702
    %vm709 = vweird.f32 %v703
    %vm710 = vmor %vm708, %vm709
    %v711 = vsel %vm710, %v703, %v707
    %v712 = vand.u32 2147483647, %v702
    %vm713 = vcmp.eq.f32.partialorder %v712, 8.507059e+37
    %v714 = vand.u32 %v702, 2147483648
    %v715 = vor.u32 1.1754944e-38, %v714
    %v716 = vsel %vm713, %v715, %v711
    %v717 = vmul.f32 1.0, %v716
    %v718 = vtanh.pop %v698
    %v719 = vmul.f32 %v717, %v666
    %721 = vrot.lane.b32.xlu0 %v718, 64
    %v722 = vpop.permute.xlu0 %721
    %v724 = vmul.f32 %v717, %v722
    %726 = vrot.lane.b32.xlu0 %v724, 32
    %v727 = vpop.permute.xlu0 %726
    %v729 = vadd.f32 %v719, %v727
    %v730 = vtanh.pop %v729
    %732 = vrot.lane.b32.xlu0 %v730, 64
    %v733 = vpop.permute.xlu0 %732
    %v735 = vmul.f32 %v717, %v733
    %737 = vrot.lane.b32.xlu0 %v735, 32
    %v738 = vpop.permute.xlu0 %737
    %v739 = vsel %vm251, %v738, 0
    %741 = vmatpush.msra.mxu0 0.0
    %742 = vmatpush.msra.mxu0 0.0
    %743 = vmatpush.msra.mxu0 0.0
    %744 = vmatpush.msra.mxu0 0.0
    %745 = vmatpush.msra.mxu0 0.0
    %746 = vmatpush.msra.mxu0 0.0
    %747 = vmatpush.msra.mxu0 0.0
    %748 = vmatpush.msra.mxu0 0.0
    %749 = vmatpush.msra.mxu0 0.0
    %750 = vmatpush.msra.mxu0 0.0
    %751 = vmatpush.msra.mxu0 0.0
    %752 = vmatpush.msra.mxu0 0.0
    %753 = vmatpush.msra.mxu0 %v296
    %754 = vmatpush.msra.mxu0 %v295
    %755 = vmatpush.msra.mxu0 %v294
    %756 = vmatpush.msra.mxu0 %v293
    %757 = vmatmul.f32.gmra.mxu0 %v739
    %v758 = vpop.f32.mrf.mxu0
    %v759 = vadd.f32 0.0, %v758
    %760 = vdwg.mxu0
    %v761 = vadd.f32 %v291, %v759
    %v762 = vxor.u32 %v761, 2147483648
    %v763 = vmul.f32 %v762, 1.442695
    %v764 = vpow.pop %v763
    %v765 = vadd.f32 %v764, 1.0
    %v766 = vrcp.pop %v765
    %v767 = vmul.f32 %v765, %v766
    %v768 = vsub.f32 1.0, %v767
    %v769 = vmul.f32 %v766, %v768
    %v770 = vadd.f32 %v766, %v769
    %vm771 = vweird.f32 %v765
    %vm772 = vweird.f32 %v766
    %vm773 = vmor %vm771, %vm772
    %v774 = vsel %vm773, %v766, %v770
    %v775 = vand.u32 2147483647, %v765
    %vm776 = vcmp.eq.f32.partialorder %v775, 8.507059e+37
    %v777 = vand.u32 %v765, 2147483648
    %v778 = vor.u32 1.1754944e-38, %v777
    %v779 = vsel %vm776, %v778, %v774
    %v780 = vmul.f32 1.0, %v779
    %v781 = vtanh.pop %v761
    %v782 = vmul.f32 %v780, %v729
    %784 = vrot.lane.b32.xlu0 %v781, 64
    %v785 = vpop.permute.xlu0 %784
    %v787 = vmul.f32 %v780, %v785
    %789 = vrot.lane.b32.xlu0 %v787, 32
    %v790 = vpop.permute.xlu0 %789
    %v792 = vadd.f32 %v782, %v790
    %v793 = vtanh.pop %v792
    %795 = vrot.lane.b32.xlu0 %v793, 64
    %v796 = vpop.permute.xlu0 %795
    %v798 = vmul.f32 %v780, %v796
    %v799 = vpack.c.bf16 %v211, %v211
    %v800 = vpack.c.bf16 %v212, %v212
    %v801 = vpack.c.bf16 %v213, %v213
    %v802 = vpack.c.bf16 %v214, %v214
    %v803 = vpack.c.bf16 %v215, %v215
    %v804 = vpack.c.bf16 %v216, %v216
    %v805 = vpack.c.bf16 %v217, %v217
    %v806 = vpack.c.bf16 %v218, %v218
    %v807 = vld [vmem:[#allocation7] sm:$0xff]
    %v808 = vld [vmem:[#allocation7 + $0x8] sm:$0xff]
    %v809 = vld [vmem:[#allocation7 + $0x10] sm:$0xff]
    %v810 = vld [vmem:[#allocation7 + $0x18] sm:$0xff]
    %v811 = vld [vmem:[#allocation7 + $0x20] sm:$0xff]
    %v812 = vld [vmem:[#allocation7 + $0x28] sm:$0xff]
    %v813 = vld [vmem:[#allocation7 + $0x30] sm:$0xff]
    %v814 = vld [vmem:[#allocation7 + $0x38] sm:$0xff]
    %v815 = vld [vmem:[#allocation7 + $0x40] sm:$0xff]
    %v816 = vld [vmem:[#allocation7 + $0x48] sm:$0xff]
    %v817 = vld [vmem:[#allocation7 + $0x50] sm:$0xff]
    %v818 = vld [vmem:[#allocation7 + $0x58] sm:$0xff]
    %v819 = vld [vmem:[#allocation7 + $0x60] sm:$0xff]
    %v820 = vld [vmem:[#allocation7 + $0x68] sm:$0xff]
    %v821 = vld [vmem:[#allocation7 + $0x70] sm:$0xff]
    %v822 = vld [vmem:[#allocation7 + $0x78] sm:$0xff]
    %v823 = vld [vmem:[#allocation7 + $0x80] sm:$0xff]
    %v824 = vld [vmem:[#allocation7 + $0x88] sm:$0xff]
    %v825 = vld [vmem:[#allocation7 + $0x90] sm:$0xff]
    %v826 = vld [vmem:[#allocation7 + $0x98] sm:$0xff]
    %v827 = vld [vmem:[#allocation7 + $0xa0] sm:$0xff]
    %v828 = vld [vmem:[#allocation7 + $0xa8] sm:$0xff]
    %v829 = vld [vmem:[#allocation7 + $0xb0] sm:$0xff]
    %v830 = vld [vmem:[#allocation7 + $0xb8] sm:$0xff]
    %v831 = vld [vmem:[#allocation7 + $0xc0] sm:$0xff]
    %v832 = vld [vmem:[#allocation7 + $0xc8] sm:$0xff]
    %v833 = vld [vmem:[#allocation7 + $0xd0] sm:$0xff]
    %v834 = vld [vmem:[#allocation7 + $0xd8] sm:$0xff]
    %v835 = vld [vmem:[#allocation7 + $0xe0] sm:$0xff]
    %v836 = vld [vmem:[#allocation7 + $0xe8] sm:$0xff]
    %v837 = vld [vmem:[#allocation7 + $0xf0] sm:$0xff]
    %v838 = vld [vmem:[#allocation7 + $0xf8] sm:$0xff]
    %v839 = vld [vmem:[#allocation7 + $0x100] sm:$0xff]
    %v840 = vld [vmem:[#allocation7 + $0x108] sm:$0xff]
    %v841 = vld [vmem:[#allocation7 + $0x110] sm:$0xff]
    %v842 = vld [vmem:[#allocation7 + $0x118] sm:$0xff]
    %v843 = vld [vmem:[#allocation7 + $0x120] sm:$0xff]
    %v844 = vld [vmem:[#allocation7 + $0x128] sm:$0xff]
    %v845 = vld [vmem:[#allocation7 + $0x130] sm:$0xff]
    %v846 = vld [vmem:[#allocation7 + $0x138] sm:$0xff]
    %v855 = vunpack.c.l.b16 %v799
    %v856 = vunpack.c.l.b16 %v800
    %v857 = vunpack.c.l.b16 %v801
    %v858 = vunpack.c.l.b16 %v802
    %v859 = vunpack.c.l.b16 %v803
    %v860 = vunpack.c.l.b16 %v804
    %v861 = vunpack.c.l.b16 %v805
    %v862 = vunpack.c.l.b16 %v806
    %vm863 = vcmask 1041409
    %v864 = vsel %vm863, %v856, %v855
    %vm865 = vcmask 1042434
    %v866 = vsel %vm865, %v857, %v864
    %vm867 = vcmask 1043459
    %v868 = vsel %vm867, %v858, %v866
    %vm869 = vcmask 1044484
    %v870 = vsel %vm869, %v859, %v868
    %vm871 = vcmask 1045509
    %v872 = vsel %vm871, %v860, %v870
    %vm873 = vcmask 1046534
    %v874 = vsel %vm873, %v861, %v872
    %vm875 = vcmask 1047559
    %v876 = vsel %vm875, %v862, %v874
    %v877 = vpack.c.b16 %v876, %v876
    %v918 = vunpack.c.l.b16 %v807
    %v919 = vunpack.c.h.b16 %v807
    %v920 = vunpack.c.l.b16 %v808
    %v921 = vunpack.c.h.b16 %v808
    %v922 = vunpack.c.l.b16 %v809
    %v923 = vunpack.c.h.b16 %v809
    %v924 = vunpack.c.l.b16 %v810
    %v925 = vunpack.c.h.b16 %v810
    %v926 = vunpack.c.l.b16 %v811
    %v927 = vunpack.c.h.b16 %v811
    %v928 = vunpack.c.l.b16 %v812
    %v929 = vunpack.c.h.b16 %v812
    %v930 = vunpack.c.l.b16 %v813
    %v931 = vunpack.c.h.b16 %v813
    %v932 = vunpack.c.l.b16 %v814
    %v933 = vunpack.c.h.b16 %v814
    %v934 = vunpack.c.l.b16 %v815
    %v935 = vunpack.c.h.b16 %v815
    %v936 = vunpack.c.l.b16 %v816
    %v937 = vunpack.c.h.b16 %v816
    %v938 = vunpack.c.l.b16 %v817
    %v939 = vunpack.c.h.b16 %v817
    %v940 = vunpack.c.l.b16 %v818
    %v941 = vunpack.c.h.b16 %v818
    %v942 = vunpack.c.l.b16 %v819
    %v943 = vunpack.c.h.b16 %v819
    %v944 = vunpack.c.l.b16 %v820
    %v945 = vunpack.c.h.b16 %v820
    %v946 = vunpack.c.l.b16 %v821
    %v947 = vunpack.c.h.b16 %v821
    %v948 = vunpack.c.l.b16 %v822
    %v949 = vunpack.c.h.b16 %v822
    %v950 = vunpack.c.l.b16 %v823
    %v951 = vunpack.c.h.b16 %v823
    %v952 = vunpack.c.l.b16 %v824
    %v953 = vunpack.c.h.b16 %v824
    %v954 = vunpack.c.l.b16 %v825
    %v955 = vunpack.c.h.b16 %v825
    %v956 = vunpack.c.l.b16 %v826
    %v957 = vunpack.c.h.b16 %v826
    %v958 = vunpack.c.l.b16 %v827
    %v959 = vunpack.c.h.b16 %v827
    %v960 = vunpack.c.l.b16 %v828
    %v961 = vunpack.c.h.b16 %v828
    %v962 = vunpack.c.l.b16 %v829
    %v963 = vunpack.c.h.b16 %v829
    %v964 = vunpack.c.l.b16 %v830
    %v965 = vunpack.c.h.b16 %v830
    %v966 = vunpack.c.l.b16 %v831
    %v967 = vunpack.c.h.b16 %v831
    %v968 = vunpack.c.l.b16 %v832
    %v969 = vunpack.c.h.b16 %v832
    %v970 = vunpack.c.l.b16 %v833
    %v971 = vunpack.c.h.b16 %v833
    %v972 = vunpack.c.l.b16 %v834
    %v973 = vunpack.c.h.b16 %v834
    %v974 = vunpack.c.l.b16 %v835
    %v975 = vunpack.c.h.b16 %v835
    %v976 = vunpack.c.l.b16 %v836
    %v977 = vunpack.c.h.b16 %v836
    %v978 = vunpack.c.l.b16 %v837
    %v979 = vunpack.c.h.b16 %v837
    %v980 = vunpack.c.l.b16 %v838
    %v981 = vunpack.c.h.b16 %v838
    %v982 = vunpack.c.l.b16 %v839
    %v983 = vunpack.c.h.b16 %v839
    %v984 = vunpack.c.l.b16 %v840
    %v985 = vunpack.c.h.b16 %v840
    %v986 = vunpack.c.l.b16 %v841
    %v987 = vunpack.c.h.b16 %v841
    %v988 = vunpack.c.l.b16 %v842
    %v989 = vunpack.c.h.b16 %v842
    %v990 = vunpack.c.l.b16 %v843
    %v991 = vunpack.c.h.b16 %v843
    %v992 = vunpack.c.l.b16 %v844
    %v993 = vunpack.c.h.b16 %v844
    %v994 = vunpack.c.l.b16 %v845
    %v995 = vunpack.c.h.b16 %v845
    %v996 = vunpack.c.l.b16 %v846
    %v997 = vunpack.c.h.b16 %v846
    %v998 = vpack.c.b16 %v928, %v918
    %v999 = vpack.c.b16 %v929, %v919
    %v1000 = vpack.c.b16 %v930, %v920
    %v1001 = vpack.c.b16 %v931, %v921
    %v1002 = vpack.c.b16 %v932, %v922
    %v1003 = vpack.c.b16 %v933, %v923
    %v1004 = vpack.c.b16 %v934, %v924
    %v1005 = vpack.c.b16 %v935, %v925
    %v1006 = vpack.c.b16 %v936, %v926
    %v1007 = vpack.c.b16 %v937, %v927
    %v1008 = vpack.c.b16 %v948, %v938
    %v1009 = vpack.c.b16 %v949, %v939
    %v1010 = vpack.c.b16 %v950, %v940
    %v1011 = vpack.c.b16 %v951, %v941
    %v1012 = vpack.c.b16 %v952, %v942
    %v1013 = vpack.c.b16 %v953, %v943
    %v1014 = vpack.c.b16 %v954, %v944
    %v1015 = vpack.c.b16 %v955, %v945
    %v1016 = vpack.c.b16 %v956, %v946
    %v1017 = vpack.c.b16 %v957, %v947
    %v1018 = vpack.c.b16 %v968, %v958
    %v1019 = vpack.c.b16 %v969, %v959
    %v1020 = vpack.c.b16 %v970, %v960
    %v1021 = vpack.c.b16 %v971, %v961
    %v1022 = vpack.c.b16 %v972, %v962
    %v1023 = vpack.c.b16 %v973, %v963
    %v1024 = vpack.c.b16 %v974, %v964
    %v1025 = vpack.c.b16 %v975, %v965
    %v1026 = vpack.c.b16 %v976, %v966
    %v1027 = vpack.c.b16 %v977, %v967
    %v1028 = vpack.c.b16 %v988, %v978
    %v1029 = vpack.c.b16 %v989, %v979
    %v1030 = vpack.c.b16 %v990, %v980
    %v1031 = vpack.c.b16 %v991, %v981
    %v1032 = vpack.c.b16 %v992, %v982
    %v1033 = vpack.c.b16 %v993, %v983
    %v1034 = vpack.c.b16 %v994, %v984
    %v1035 = vpack.c.b16 %v995, %v985
    %v1036 = vpack.c.b16 %v996, %v986
    %v1037 = vpack.c.b16 %v997, %v987
    %v1079 = vsel %vm131, %v877, 0
    %1081 = vmatpush.bf16.msra.mxu0 0
    %1082 = vmatpush.bf16.msra.mxu0 0
    %1083 = vmatpush.bf16.msra.mxu0 0
    %1084 = vmatpush.bf16.msra.mxu0 0
    %1085 = vmatpush.bf16.msra.mxu0 %v1028
    %1086 = vmatpush.bf16.msra.mxu0 %v1018
    %1087 = vmatpush.bf16.msra.mxu0 %v1008
    %1088 = vmatpush.bf16.msra.mxu0 %v998
    %1089 = vmatmul.bf16.gmra.mxu0 %v1079
    %v1090 = vpop.f32.mrf.mxu0
    %v1091 = vadd.f32 0.0, %v1090
    %v1092 = vpop.f32.mrf.mxu0
    %1093 = vdwg.mxu0
    %1094 = vmatpush.bf16.msra.mxu0 0
    %1095 = vmatpush.bf16.msra.mxu0 0
    %1096 = vmatpush.bf16.msra.mxu0 0
    %1097 = vmatpush.bf16.msra.mxu0 0
    %1098 = vmatpush.bf16.msra.mxu0 %v1029
    %1099 = vmatpush.bf16.msra.mxu0 %v1019
    %1100 = vmatpush.bf16.msra.mxu0 %v1009
    %1101 = vmatpush.bf16.msra.mxu0 %v999
    %1102 = vmatmul.bf16.gmra.mxu0 %v1079
    %v1103 = vpop.f32.mrf.mxu0
    %v1104 = vadd.f32 0.0, %v1103
    %v1105 = vpop.f32.mrf.mxu0
    %1106 = vdwg.mxu0
    %1107 = vmatpush.bf16.msra.mxu0 0
    %1108 = vmatpush.bf16.msra.mxu0 0
    %1109 = vmatpush.bf16.msra.mxu0 0
    %1110 = vmatpush.bf16.msra.mxu0 0
    %1111 = vmatpush.bf16.msra.mxu0 %v1030
    %1112 = vmatpush.bf16.msra.mxu0 %v1020
    %1113 = vmatpush.bf16.msra.mxu0 %v1010
    %1114 = vmatpush.bf16.msra.mxu0 %v1000
    %1115 = vmatmul.bf16.gmra.mxu0 %v1079
    %v1116 = vpop.f32.mrf.mxu0
    %v1117 = vadd.f32 0.0, %v1116
    %v1118 = vpop.f32.mrf.mxu0
    %1119 = vdwg.mxu0
    %1120 = vmatpush.bf16.msra.mxu0 0
    %1121 = vmatpush.bf16.msra.mxu0 0
    %1122 = vmatpush.bf16.msra.mxu0 0
    %1123 = vmatpush.bf16.msra.mxu0 0
    %1124 = vmatpush.bf16.msra.mxu0 %v1031
    %1125 = vmatpush.bf16.msra.mxu0 %v1021
    %1126 = vmatpush.bf16.msra.mxu0 %v1011
    %1127 = vmatpush.bf16.msra.mxu0 %v1001
    %1128 = vmatmul.bf16.gmra.mxu0 %v1079
    %v1129 = vpop.f32.mrf.mxu0
    %v1130 = vadd.f32 0.0, %v1129
    %v1131 = vpop.f32.mrf.mxu0
    %1132 = vdwg.mxu0
    %1133 = vmatpush.bf16.msra.mxu0 0
    %1134 = vmatpush.bf16.msra.mxu0 0
    %1135 = vmatpush.bf16.msra.mxu0 0
    %1136 = vmatpush.bf16.msra.mxu0 0
    %1137 = vmatpush.bf16.msra.mxu0 %v1032
    %1138 = vmatpush.bf16.msra.mxu0 %v1022
    %1139 = vmatpush.bf16.msra.mxu0 %v1012
    %1140 = vmatpush.bf16.msra.mxu0 %v1002
    %1141 = vmatmul.bf16.gmra.mxu0 %v1079
    %v1142 = vpop.f32.mrf.mxu0
    %v1143 = vadd.f32 0.0, %v1142
    %v1144 = vpop.f32.mrf.mxu0
    %1145 = vdwg.mxu0
    %1146 = vmatpush.bf16.msra.mxu0 0
    %1147 = vmatpush.bf16.msra.mxu0 0
    %1148 = vmatpush.bf16.msra.mxu0 0
    %1149 = vmatpush.bf16.msra.mxu0 0
    %1150 = vmatpush.bf16.msra.mxu0 %v1033
    %1151 = vmatpush.bf16.msra.mxu0 %v1023
    %1152 = vmatpush.bf16.msra.mxu0 %v1013
    %1153 = vmatpush.bf16.msra.mxu0 %v1003
    %1154 = vmatmul.bf16.gmra.mxu0 %v1079
    %v1155 = vpop.f32.mrf.mxu0
    %v1156 = vadd.f32 0.0, %v1155
    %v1157 = vpop.f32.mrf.mxu0
    %1158 = vdwg.mxu0
    %1159 = vmatpush.bf16.msra.mxu0 0
    %1160 = vmatpush.bf16.msra.mxu0 0
    %1161 = vmatpush.bf16.msra.mxu0 0
    %1162 = vmatpush.bf16.msra.mxu0 0
    %1163 = vmatpush.bf16.msra.mxu0 %v1034
    %1164 = vmatpush.bf16.msra.mxu0 %v1024
    %1165 = vmatpush.bf16.msra.mxu0 %v1014
    %1166 = vmatpush.bf16.msra.mxu0 %v1004
    %1167 = vmatmul.bf16.gmra.mxu0 %v1079
    %v1168 = vpop.f32.mrf.mxu0
    %v1169 = vadd.f32 0.0, %v1168
    %v1170 = vpop.f32.mrf.mxu0
    %1171 = vdwg.mxu0
    %1172 = vmatpush.bf16.msra.mxu0 0
    %1173 = vmatpush.bf16.msra.mxu0 0
    %1174 = vmatpush.bf16.msra.mxu0 0
    %1175 = vmatpush.bf16.msra.mxu0 0
    %1176 = vmatpush.bf16.msra.mxu0 %v1035
    %1177 = vmatpush.bf16.msra.mxu0 %v1025
    %1178 = vmatpush.bf16.msra.mxu0 %v1015
    %1179 = vmatpush.bf16.msra.mxu0 %v1005
    %1180 = vmatmul.bf16.gmra.mxu0 %v1079
    %v1181 = vpop.f32.mrf.mxu0
    %v1182 = vadd.f32 0.0, %v1181
    %v1183 = vpop.f32.mrf.mxu0
    %1184 = vdwg.mxu0
    %1185 = vmatpush.bf16.msra.mxu0 0
    %1186 = vmatpush.bf16.msra.mxu0 0
    %1187 = vmatpush.bf16.msra.mxu0 0
    %1188 = vmatpush.bf16.msra.mxu0 0
    %1189 = vmatpush.bf16.msra.mxu0 %v1036
    %1190 = vmatpush.bf16.msra.mxu0 %v1026
    %1191 = vmatpush.bf16.msra.mxu0 %v1016
    %1192 = vmatpush.bf16.msra.mxu0 %v1006
    %1193 = vmatmul.bf16.gmra.mxu0 %v1079
    %v1194 = vpop.f32.mrf.mxu0
    %v1195 = vadd.f32 0.0, %v1194
    %v1196 = vpop.f32.mrf.mxu0
    %1197 = vdwg.mxu0
    %1198 = vmatpush.bf16.msra.mxu0 0
    %1199 = vmatpush.bf16.msra.mxu0 0
    %1200 = vmatpush.bf16.msra.mxu0 0
    %1201 = vmatpush.bf16.msra.mxu0 0
    %1202 = vmatpush.bf16.msra.mxu0 %v1037
    %1203 = vmatpush.bf16.msra.mxu0 %v1027
    %1204 = vmatpush.bf16.msra.mxu0 %v1017
    %1205 = vmatpush.bf16.msra.mxu0 %v1007
    %1206 = vmatmul.bf16.gmra.mxu0 %v1079
    %v1207 = vpop.f32.mrf.mxu0
    %v1208 = vadd.f32 0.0, %v1207
    %v1209 = vpop.f32.mrf.mxu0
    %1210 = vdwg.mxu0
    %v1211 = vpack.c.bf16 %v798, %v798
    %v1212 = vld [vmem:[#allocation8] sm:$0xff]
    %v1213 = vld [vmem:[#allocation8 + $0x8] sm:$0xff]
    %v1214 = vld [vmem:[#allocation8 + $0x10] sm:$0xff]
    %v1215 = vld [vmem:[#allocation8 + $0x18] sm:$0xff]
    %v1216 = vld [vmem:[#allocation8 + $0x20] sm:$0xff]
    %v1217 = vld [vmem:[#allocation8 + $0x28] sm:$0xff]
    %v1218 = vld [vmem:[#allocation8 + $0x30] sm:$0xff]
    %v1219 = vld [vmem:[#allocation8 + $0x38] sm:$0xff]
    %v1220 = vld [vmem:[#allocation8 + $0x40] sm:$0xff]
    %v1221 = vld [vmem:[#allocation8 + $0x48] sm:$0xff]
    %v1222 = vld [vmem:[#allocation8 + $0x50] sm:$0xff]
    %v1223 = vld [vmem:[#allocation8 + $0x58] sm:$0xff]
    %v1224 = vld [vmem:[#allocation8 + $0x60] sm:$0xff]
    %v1225 = vld [vmem:[#allocation8 + $0x68] sm:$0xff]
    %v1226 = vld [vmem:[#allocation8 + $0x70] sm:$0xff]
    %v1227 = vld [vmem:[#allocation8 + $0x78] sm:$0xff]
    %v1228 = vld [vmem:[#allocation8 + $0x80] sm:$0xff]
    %v1229 = vld [vmem:[#allocation8 + $0x88] sm:$0xff]
    %v1230 = vld [vmem:[#allocation8 + $0x90] sm:$0xff]
    %v1231 = vld [vmem:[#allocation8 + $0x98] sm:$0xff]
    %1233 = vrot.lane.b32.xlu0 %v1211, 32
    %v1234 = vpop.permute.xlu0 %1233
    %v1255 = vunpack.c.l.b16 %v1212
    %v1256 = vunpack.c.h.b16 %v1212
    %v1257 = vunpack.c.l.b16 %v1213
    %v1258 = vunpack.c.h.b16 %v1213
    %v1259 = vunpack.c.l.b16 %v1214
    %v1260 = vunpack.c.h.b16 %v1214
    %v1261 = vunpack.c.l.b16 %v1215
    %v1262 = vunpack.c.h.b16 %v1215
    %v1263 = vunpack.c.l.b16 %v1216
    %v1264 = vunpack.c.h.b16 %v1216
    %v1265 = vunpack.c.l.b16 %v1217
    %v1266 = vunpack.c.h.b16 %v1217
    %v1267 = vunpack.c.l.b16 %v1218
    %v1268 = vunpack.c.h.b16 %v1218
    %v1269 = vunpack.c.l.b16 %v1219
    %v1270 = vunpack.c.h.b16 %v1219
    %v1271 = vunpack.c.l.b16 %v1220
    %v1272 = vunpack.c.h.b16 %v1220
    %v1273 = vunpack.c.l.b16 %v1221
    %v1274 = vunpack.c.h.b16 %v1221
    %v1275 = vunpack.c.l.b16 %v1222
    %v1276 = vunpack.c.h.b16 %v1222
    %v1277 = vunpack.c.l.b16 %v1223
    %v1278 = vunpack.c.h.b16 %v1223
    %v1279 = vunpack.c.l.b16 %v1224
    %v1280 = vunpack.c.h.b16 %v1224
    %v1281 = vunpack.c.l.b16 %v1225
    %v1282 = vunpack.c.h.b16 %v1225
    %v1283 = vunpack.c.l.b16 %v1226
    %v1284 = vunpack.c.h.b16 %v1226
    %v1285 = vunpack.c.l.b16 %v1227
    %v1286 = vunpack.c.h.b16 %v1227
    %v1287 = vunpack.c.l.b16 %v1228
    %v1288 = vunpack.c.h.b16 %v1228
    %v1289 = vunpack.c.l.b16 %v1229
    %v1290 = vunpack.c.h.b16 %v1229
    %v1291 = vunpack.c.l.b16 %v1230
    %v1292 = vunpack.c.h.b16 %v1230
    %v1293 = vunpack.c.l.b16 %v1231
    %v1294 = vunpack.c.h.b16 %v1231
    %v1295 = vpack.c.b16 %v1265, %v1255
    %v1296 = vpack.c.b16 %v1266, %v1256
    %v1297 = vpack.c.b16 %v1267, %v1257
    %v1298 = vpack.c.b16 %v1268, %v1258
    %v1299 = vpack.c.b16 %v1269, %v1259
    %v1300 = vpack.c.b16 %v1270, %v1260
    %v1301 = vpack.c.b16 %v1271, %v1261
    %v1302 = vpack.c.b16 %v1272, %v1262
    %v1303 = vpack.c.b16 %v1273, %v1263
    %v1304 = vpack.c.b16 %v1274, %v1264
    %v1305 = vpack.c.b16 %v1285, %v1275
    %v1306 = vpack.c.b16 %v1286, %v1276
    %v1307 = vpack.c.b16 %v1287, %v1277
    %v1308 = vpack.c.b16 %v1288, %v1278
    %v1309 = vpack.c.b16 %v1289, %v1279
    %v1310 = vpack.c.b16 %v1290, %v1280
    %v1311 = vpack.c.b16 %v1291, %v1281
    %v1312 = vpack.c.b16 %v1292, %v1282
    %v1313 = vpack.c.b16 %v1293, %v1283
    %v1314 = vpack.c.b16 %v1294, %v1284
    %v1336 = vsel %vm251, %v1234, 0
    %1338 = vmatpush.bf16.msra.mxu0 0
    %1339 = vmatpush.bf16.msra.mxu0 0
    %1340 = vmatpush.bf16.msra.mxu0 0
    %1341 = vmatpush.bf16.msra.mxu0 0
    %1342 = vmatpush.bf16.msra.mxu0 0
    %1343 = vmatpush.bf16.msra.mxu0 0
    %1344 = vmatpush.bf16.msra.mxu0 %v1305
    %1345 = vmatpush.bf16.msra.mxu0 %v1295
    %1346 = vmatmul.bf16.gmra.mxu0 %v1336
    %v1347 = vpop.f32.mrf.mxu0
    %v1348 = vadd.f32 0.0, %v1347
    %v1349 = vpop.f32.mrf.mxu0
    %1350 = vdwg.mxu0
    %1351 = vmatpush.bf16.msra.mxu0 0
    %1352 = vmatpush.bf16.msra.mxu0 0
    %1353 = vmatpush.bf16.msra.mxu0 0
    %1354 = vmatpush.bf16.msra.mxu0 0
    %1355 = vmatpush.bf16.msra.mxu0 0
    %1356 = vmatpush.bf16.msra.mxu0 0
    %1357 = vmatpush.bf16.msra.mxu0 %v1306
    %1358 = vmatpush.bf16.msra.mxu0 %v1296
    %1359 = vmatmul.bf16.gmra.mxu0 %v1336
    %v1360 = vpop.f32.mrf.mxu0
    %v1361 = vadd.f32 0.0, %v1360
    %v1362 = vpop.f32.mrf.mxu0
    %1363 = vdwg.mxu0
    %1364 = vmatpush.bf16.msra.mxu0 0
    %1365 = vmatpush.bf16.msra.mxu0 0
    %1366 = vmatpush.bf16.msra.mxu0 0
    %1367 = vmatpush.bf16.msra.mxu0 0
    %1368 = vmatpush.bf16.msra.mxu0 0
    %1369 = vmatpush.bf16.msra.mxu0 0
    %1370 = vmatpush.bf16.msra.mxu0 %v1307
    %1371 = vmatpush.bf16.msra.mxu0 %v1297
    %1372 = vmatmul.bf16.gmra.mxu0 %v1336
    %v1373 = vpop.f32.mrf.mxu0
    %v1374 = vadd.f32 0.0, %v1373
    %v1375 = vpop.f32.mrf.mxu0
    %1376 = vdwg.mxu0
    %1377 = vmatpush.bf16.msra.mxu0 0
    %1378 = vmatpush.bf16.msra.mxu0 0
    %1379 = vmatpush.bf16.msra.mxu0 0
    %1380 = vmatpush.bf16.msra.mxu0 0
    %1381 = vmatpush.bf16.msra.mxu0 0
    %1382 = vmatpush.bf16.msra.mxu0 0
    %1383 = vmatpush.bf16.msra.mxu0 %v1308
    %1384 = vmatpush.bf16.msra.mxu0 %v1298
    %1385 = vmatmul.bf16.gmra.mxu0 %v1336
    %v1386 = vpop.f32.mrf.mxu0
    %v1387 = vadd.f32 0.0, %v1386
    %v1388 = vpop.f32.mrf.mxu0
    %1389 = vdwg.mxu0
    %1390 = vmatpush.bf16.msra.mxu0 0
    %1391 = vmatpush.bf16.msra.mxu0 0
    %1392 = vmatpush.bf16.msra.mxu0 0
    %1393 = vmatpush.bf16.msra.mxu0 0
    %1394 = vmatpush.bf16.msra.mxu0 0
    %1395 = vmatpush.bf16.msra.mxu0 0
    %1396 = vmatpush.bf16.msra.mxu0 %v1309
    %1397 = vmatpush.bf16.msra.mxu0 %v1299
    %1398 = vmatmul.bf16.gmra.mxu0 %v1336
    %v1399 = vpop.f32.mrf.mxu0
    %v1400 = vadd.f32 0.0, %v1399
    %v1401 = vpop.f32.mrf.mxu0
    %1402 = vdwg.mxu0
    %1403 = vmatpush.bf16.msra.mxu0 0
    %1404 = vmatpush.bf16.msra.mxu0 0
    %1405 = vmatpush.bf16.msra.mxu0 0
    %1406 = vmatpush.bf16.msra.mxu0 0
    %1407 = vmatpush.bf16.msra.mxu0 0
    %1408 = vmatpush.bf16.msra.mxu0 0
    %1409 = vmatpush.bf16.msra.mxu0 %v1310
    %1410 = vmatpush.bf16.msra.mxu0 %v1300
    %1411 = vmatmul.bf16.gmra.mxu0 %v1336
    %v1412 = vpop.f32.mrf.mxu0
    %v1413 = vadd.f32 0.0, %v1412
    %v1414 = vpop.f32.mrf.mxu0
    %1415 = vdwg.mxu0
    %1416 = vmatpush.bf16.msra.mxu0 0
    %1417 = vmatpush.bf16.msra.mxu0 0
    %1418 = vmatpush.bf16.msra.mxu0 0
    %1419 = vmatpush.bf16.msra.mxu0 0
    %1420 = vmatpush.bf16.msra.mxu0 0
    %1421 = vmatpush.bf16.msra.mxu0 0
    %1422 = vmatpush.bf16.msra.mxu0 %v1311
    %1423 = vmatpush.bf16.msra.mxu0 %v1301
    %1424 = vmatmul.bf16.gmra.mxu0 %v1336
    %v1425 = vpop.f32.mrf.mxu0
    %v1426 = vadd.f32 0.0, %v1425
    %v1427 = vpop.f32.mrf.mxu0
    %1428 = vdwg.mxu0
    %1429 = vmatpush.bf16.msra.mxu0 0
    %1430 = vmatpush.bf16.msra.mxu0 0
    %1431 = vmatpush.bf16.msra.mxu0 0
    %1432 = vmatpush.bf16.msra.mxu0 0
    %1433 = vmatpush.bf16.msra.mxu0 0
    %1434 = vmatpush.bf16.msra.mxu0 0
    %1435 = vmatpush.bf16.msra.mxu0 %v1312
    %1436 = vmatpush.bf16.msra.mxu0 %v1302
    %1437 = vmatmul.bf16.gmra.mxu0 %v1336
    %v1438 = vpop.f32.mrf.mxu0
    %v1439 = vadd.f32 0.0, %v1438
    %v1440 = vpop.f32.mrf.mxu0
    %1441 = vdwg.mxu0
    %1442 = vmatpush.bf16.msra.mxu0 0
    %1443 = vmatpush.bf16.msra.mxu0 0
    %1444 = vmatpush.bf16.msra.mxu0 0
    %1445 = vmatpush.bf16.msra.mxu0 0
    %1446 = vmatpush.bf16.msra.mxu0 0
    %1447 = vmatpush.bf16.msra.mxu0 0
    %1448 = vmatpush.bf16.msra.mxu0 %v1313
    %1449 = vmatpush.bf16.msra.mxu0 %v1303
    %1450 = vmatmul.bf16.gmra.mxu0 %v1336
    %v1451 = vpop.f32.mrf.mxu0
    %v1452 = vadd.f32 0.0, %v1451
    %v1453 = vpop.f32.mrf.mxu0
    %1454 = vdwg.mxu0
    %1455 = vmatpush.bf16.msra.mxu0 0
    %1456 = vmatpush.bf16.msra.mxu0 0
    %1457 = vmatpush.bf16.msra.mxu0 0
    %1458 = vmatpush.bf16.msra.mxu0 0
    %1459 = vmatpush.bf16.msra.mxu0 0
    %1460 = vmatpush.bf16.msra.mxu0 0
    %1461 = vmatpush.bf16.msra.mxu0 %v1314
    %1462 = vmatpush.bf16.msra.mxu0 %v1304
    %1463 = vmatmul.bf16.gmra.mxu0 %v1336
    %v1464 = vpop.f32.mrf.mxu0
    %v1465 = vadd.f32 0.0, %v1464
    %v1466 = vpop.f32.mrf.mxu0
    %1467 = vdwg.mxu0
    %v1468 = vmul.f32 %v1091, %v1348
    %v1469 = vmul.f32 %v1104, %v1361
    %v1470 = vmul.f32 %v1117, %v1374
    %v1471 = vmul.f32 %v1130, %v1387
    %v1472 = vmul.f32 %v1143, %v1400
    %v1473 = vmul.f32 %v1156, %v1413
    %v1474 = vmul.f32 %v1169, %v1426
    %v1475 = vmul.f32 %v1182, %v1439
    %v1476 = vmul.f32 %v1195, %v1452
    %v1477 = vmul.f32 %v1208, %v1465
    %v1478 = vsub.f32 %v1468, %v1473
    %v1479 = vsub.f32 %v1469, %v1474
    %v1480 = vsub.f32 %v1470, %v1475
    %v1481 = vsub.f32 %v1471, %v1476
    %v1482 = vsub.f32 %v1472, %v1477
    %v1483 = vmul.f32 %v1091, %v1413
    %v1484 = vmul.f32 %v1104, %v1426
    %v1485 = vmul.f32 %v1117, %v1439
    %v1486 = vmul.f32 %v1130, %v1452
    %v1487 = vmul.f32 %v1143, %v1465
    %v1488 = vmul.f32 %v1156, %v1348
    %v1489 = vmul.f32 %v1169, %v1361
    %v1490 = vmul.f32 %v1182, %v1374
    %v1491 = vmul.f32 %v1195, %v1387
    %v1492 = vmul.f32 %v1208, %v1400
    %v1493 = vadd.f32 %v1483, %v1488
    %v1494 = vadd.f32 %v1484, %v1489
    %v1495 = vadd.f32 %v1485, %v1490
    %v1496 = vadd.f32 %v1486, %v1491
    %v1497 = vadd.f32 %v1487, %v1492
    %v1498 = vpack.c.bf16 %v1478, %v1478
    %v1499 = vpack.c.bf16 %v1479, %v1479
    %v1500 = vpack.c.bf16 %v1480, %v1480
    %v1501 = vpack.c.bf16 %v1481, %v1481
    %v1502 = vpack.c.bf16 %v1482, %v1482
    %v1503 = vpack.c.bf16 %v1493, %v1493
    %v1504 = vpack.c.bf16 %v1494, %v1494
    %v1505 = vpack.c.bf16 %v1495, %v1495
    %v1506 = vpack.c.bf16 %v1496, %v1496
    %v1507 = vpack.c.bf16 %v1497, %v1497
    %v1508 = vld [vmem:[#allocation10] sm:$0xf]
    %v1509 = vld [vmem:[#allocation10 + $0x4] sm:$0xf]
    %v1510 = vld [vmem:[#allocation10 + $0x8] sm:$0xf]
    %v1511 = vld [vmem:[#allocation10 + $0xc] sm:$0xf]
    %v1512 = vld [vmem:[#allocation10 + $0x10] sm:$0xf]
    %v1513 = vld [vmem:[#allocation10 + $0x14] sm:$0xf]
    %v1514 = vld [vmem:[#allocation10 + $0x18] sm:$0xf]
    %v1515 = vld [vmem:[#allocation10 + $0x1c] sm:$0xf]
    %v1516 = vld [vmem:[#allocation10 + $0x20] sm:$0xf]
    %v1517 = vld [vmem:[#allocation10 + $0x24] sm:$0xf]
    %v1518 = vld [vmem:[#allocation10 + $0x28] sm:$0xf]
    %v1519 = vld [vmem:[#allocation10 + $0x2c] sm:$0xf]
    %v1520 = vld [vmem:[#allocation10 + $0x30] sm:$0xf]
    %v1521 = vld [vmem:[#allocation10 + $0x34] sm:$0xf]
    %v1522 = vld [vmem:[#allocation10 + $0x38] sm:$0xf]
    %v1523 = vld [vmem:[#allocation10 + $0x3c] sm:$0xf]
    %v1524 = vld [vmem:[#allocation10 + $0x40] sm:$0xf]
    %v1525 = vld [vmem:[#allocation10 + $0x44] sm:$0xf]
    %v1526 = vld [vmem:[#allocation10 + $0x48] sm:$0xf]
    %v1527 = vld [vmem:[#allocation10 + $0x4c] sm:$0xf]
    %v1528 = vld [vmem:[#allocation10 + $0x50] sm:$0xf]
    %v1529 = vld [vmem:[#allocation10 + $0x54] sm:$0xf]
    %v1530 = vld [vmem:[#allocation10 + $0x58] sm:$0xf]
    %v1531 = vld [vmem:[#allocation10 + $0x5c] sm:$0xf]
    %v1532 = vld [vmem:[#allocation10 + $0x60] sm:$0xf]
    %v1533 = vld [vmem:[#allocation10 + $0x64] sm:$0xf]
    %v1534 = vld [vmem:[#allocation10 + $0x68] sm:$0xf]
    %v1535 = vld [vmem:[#allocation10 + $0x6c] sm:$0xf]
    %v1536 = vld [vmem:[#allocation10 + $0x70] sm:$0xf]
    %v1537 = vld [vmem:[#allocation10 + $0x74] sm:$0xf]
    %v1538 = vld [vmem:[#allocation10 + $0x78] sm:$0xf]
    %v1539 = vld [vmem:[#allocation10 + $0x7c] sm:$0xf]
    %v1540 = vld [vmem:[#allocation10 + $0x80] sm:$0xf]
    %v1541 = vld [vmem:[#allocation10 + $0x84] sm:$0xf]
    %v1542 = vld [vmem:[#allocation10 + $0x88] sm:$0xf]
    %v1543 = vld [vmem:[#allocation10 + $0x8c] sm:$0xf]
    %v1544 = vld [vmem:[#allocation10 + $0x90] sm:$0xf]
    %v1545 = vld [vmem:[#allocation10 + $0x94] sm:$0xf]
    %v1546 = vld [vmem:[#allocation10 + $0x98] sm:$0xf]
    %v1547 = vld [vmem:[#allocation10 + $0x9c] sm:$0xf]
    %v1548 = vld [vmem:[#allocation10 + $0xa0] sm:$0xf]
    %v1549 = vld [vmem:[#allocation10 + $0xa4] sm:$0xf]
    %v1550 = vld [vmem:[#allocation10 + $0xa8] sm:$0xf]
    %v1551 = vld [vmem:[#allocation10 + $0xac] sm:$0xf]
    %v1552 = vld [vmem:[#allocation10 + $0xb0] sm:$0xf]
    %v1553 = vld [vmem:[#allocation10 + $0xb4] sm:$0xf]
    %v1554 = vld [vmem:[#allocation10 + $0xb8] sm:$0xf]
    %v1555 = vld [vmem:[#allocation10 + $0xbc] sm:$0xf]
    %v1556 = vld [vmem:[#allocation10 + $0xc0] sm:$0xf]
    %v1557 = vld [vmem:[#allocation10 + $0xc4] sm:$0xf]
    %v1558 = vld [vmem:[#allocation10 + $0xc8] sm:$0xf]
    %v1559 = vld [vmem:[#allocation10 + $0xcc] sm:$0xf]
    %v1560 = vld [vmem:[#allocation10 + $0xd0] sm:$0xf]
    %v1561 = vld [vmem:[#allocation10 + $0xd4] sm:$0xf]
    %v1562 = vld [vmem:[#allocation10 + $0xd8] sm:$0xf]
    %v1563 = vld [vmem:[#allocation10 + $0xdc] sm:$0xf]
    %v1564 = vld [vmem:[#allocation10 + $0xe0] sm:$0xf]
    %v1565 = vld [vmem:[#allocation10 + $0xe4] sm:$0xf]
    %v1566 = vld [vmem:[#allocation10 + $0xe8] sm:$0xf]
    %v1567 = vld [vmem:[#allocation10 + $0xec] sm:$0xf]
    %v1568 = vld [vmem:[#allocation10 + $0xf0] sm:$0xf]
    %v1569 = vld [vmem:[#allocation10 + $0xf4] sm:$0xf]
    %v1570 = vld [vmem:[#allocation10 + $0xf8] sm:$0xf]
    %v1571 = vld [vmem:[#allocation10 + $0xfc] sm:$0xf]
    %v1572 = vld [vmem:[#allocation10 + $0x100] sm:$0xf]
    %v1573 = vld [vmem:[#allocation10 + $0x104] sm:$0xf]
    %v1574 = vld [vmem:[#allocation10 + $0x108] sm:$0xf]
    %v1575 = vld [vmem:[#allocation10 + $0x10c] sm:$0xf]
    %v1576 = vld [vmem:[#allocation10 + $0x110] sm:$0xf]
    %v1577 = vld [vmem:[#allocation10 + $0x114] sm:$0xf]
    %v1578 = vld [vmem:[#allocation10 + $0x118] sm:$0xf]
    %v1579 = vld [vmem:[#allocation10 + $0x11c] sm:$0xf]
    %v1580 = vld [vmem:[#allocation10 + $0x120] sm:$0xf]
    %v1581 = vld [vmem:[#allocation10 + $0x124] sm:$0xf]
    %v1582 = vld [vmem:[#allocation10 + $0x128] sm:$0xf]
    %v1583 = vld [vmem:[#allocation10 + $0x12c] sm:$0xf]
    %v1584 = vld [vmem:[#allocation10 + $0x130] sm:$0xf]
    %v1585 = vld [vmem:[#allocation10 + $0x134] sm:$0xf]
    %v1586 = vld [vmem:[#allocation10 + $0x138] sm:$0xf]
    %v1587 = vld [vmem:[#allocation10 + $0x13c] sm:$0xf]
    %v1588 = vld [vmem:[#allocation10 + $0x140] sm:$0xf]
    %v1589 = vld [vmem:[#allocation10 + $0x144] sm:$0xf]
    %v1590 = vld [vmem:[#allocation10 + $0x148] sm:$0xf]
    %v1591 = vld [vmem:[#allocation10 + $0x14c] sm:$0xf]
    %v1592 = vld [vmem:[#allocation10 + $0x150] sm:$0xf]
    %v1593 = vld [vmem:[#allocation10 + $0x154] sm:$0xf]
    %v1594 = vld [vmem:[#allocation10 + $0x158] sm:$0xf]
    %v1595 = vld [vmem:[#allocation10 + $0x15c] sm:$0xf]
    %v1596 = vld [vmem:[#allocation10 + $0x160] sm:$0xf]
    %v1597 = vld [vmem:[#allocation10 + $0x164] sm:$0xf]
    %v1598 = vld [vmem:[#allocation10 + $0x168] sm:$0xf]
    %v1599 = vld [vmem:[#allocation10 + $0x16c] sm:$0xf]
    %v1600 = vld [vmem:[#allocation10 + $0x170] sm:$0xf]
    %v1601 = vld [vmem:[#allocation10 + $0x174] sm:$0xf]
    %v1602 = vld [vmem:[#allocation10 + $0x178] sm:$0xf]
    %v1603 = vld [vmem:[#allocation10 + $0x17c] sm:$0xf]
    %v1604 = vld [vmem:[#allocation10 + $0x180] sm:$0xf]
    %v1605 = vld [vmem:[#allocation10 + $0x184] sm:$0xf]
    %v1606 = vld [vmem:[#allocation10 + $0x188] sm:$0xf]
    %v1607 = vld [vmem:[#allocation10 + $0x18c] sm:$0xf]
    %v1608 = vld [vmem:[#allocation10 + $0x190] sm:$0xf]
    %v1609 = vld [vmem:[#allocation10 + $0x194] sm:$0xf]
    %v1610 = vld [vmem:[#allocation10 + $0x198] sm:$0xf]
    %v1611 = vld [vmem:[#allocation10 + $0x19c] sm:$0xf]
    %v1612 = vld [vmem:[#allocation10 + $0x1a0] sm:$0xf]
    %v1613 = vld [vmem:[#allocation10 + $0x1a4] sm:$0xf]
    %v1614 = vld [vmem:[#allocation10 + $0x1a8] sm:$0xf]
    %v1615 = vld [vmem:[#allocation10 + $0x1ac] sm:$0xf]
    %v1616 = vld [vmem:[#allocation10 + $0x1b0] sm:$0xf]
    %v1617 = vld [vmem:[#allocation10 + $0x1b4] sm:$0xf]
    %v1618 = vld [vmem:[#allocation10 + $0x1b8] sm:$0xf]
    %v1619 = vld [vmem:[#allocation10 + $0x1bc] sm:$0xf]
    %v1620 = vld [vmem:[#allocation10 + $0x1c0] sm:$0xf]
    %v1621 = vld [vmem:[#allocation10 + $0x1c4] sm:$0xf]
    %v1622 = vld [vmem:[#allocation10 + $0x1c8] sm:$0xf]
    %v1623 = vld [vmem:[#allocation10 + $0x1cc] sm:$0xf]
    %v1624 = vld [vmem:[#allocation10 + $0x1d0] sm:$0xf]
    %v1625 = vld [vmem:[#allocation10 + $0x1d4] sm:$0xf]
    %v1626 = vld [vmem:[#allocation10 + $0x1d8] sm:$0xf]
    %v1627 = vld [vmem:[#allocation10 + $0x1dc] sm:$0xf]
    %v1628 = vld [vmem:[#allocation10 + $0x1e0] sm:$0xf]
    %v1629 = vld [vmem:[#allocation10 + $0x1e4] sm:$0xf]
    %v1630 = vld [vmem:[#allocation10 + $0x1e8] sm:$0xf]
    %v1631 = vld [vmem:[#allocation10 + $0x1ec] sm:$0xf]
    %v1632 = vld [vmem:[#allocation10 + $0x1f0] sm:$0xf]
    %v1633 = vld [vmem:[#allocation10 + $0x1f4] sm:$0xf]
    %v1634 = vld [vmem:[#allocation10 + $0x1f8] sm:$0xf]
    %v1635 = vld [vmem:[#allocation10 + $0x1fc] sm:$0xf]
    %v1636 = vld [vmem:[#allocation10 + $0x200] sm:$0xf]
    %v1637 = vld [vmem:[#allocation10 + $0x204] sm:$0xf]
    %v1638 = vld [vmem:[#allocation10 + $0x208] sm:$0xf]
    %v1639 = vld [vmem:[#allocation10 + $0x20c] sm:$0xf]
    %v1640 = vld [vmem:[#allocation10 + $0x210] sm:$0xf]
    %v1641 = vld [vmem:[#allocation10 + $0x214] sm:$0xf]
    %v1642 = vld [vmem:[#allocation10 + $0x218] sm:$0xf]
    %v1643 = vld [vmem:[#allocation10 + $0x21c] sm:$0xf]
    %v1644 = vld [vmem:[#allocation10 + $0x220] sm:$0xf]
    %v1645 = vld [vmem:[#allocation10 + $0x224] sm:$0xf]
    %v1646 = vld [vmem:[#allocation10 + $0x228] sm:$0xf]
    %v1647 = vld [vmem:[#allocation10 + $0x22c] sm:$0xf]
    %v1648 = vld [vmem:[#allocation10 + $0x230] sm:$0xf]
    %v1649 = vld [vmem:[#allocation10 + $0x234] sm:$0xf]
    %v1650 = vld [vmem:[#allocation10 + $0x238] sm:$0xf]
    %v1651 = vld [vmem:[#allocation10 + $0x23c] sm:$0xf]
    %v1652 = vld [vmem:[#allocation10 + $0x240] sm:$0xf]
    %v1653 = vld [vmem:[#allocation10 + $0x244] sm:$0xf]
    %v1654 = vld [vmem:[#allocation10 + $0x248] sm:$0xf]
    %v1655 = vld [vmem:[#allocation10 + $0x24c] sm:$0xf]
    %v1656 = vld [vmem:[#allocation10 + $0x250] sm:$0xf]
    %v1657 = vld [vmem:[#allocation10 + $0x254] sm:$0xf]
    %v1658 = vld [vmem:[#allocation10 + $0x258] sm:$0xf]
    %v1659 = vld [vmem:[#allocation10 + $0x25c] sm:$0xf]
    %v1660 = vld [vmem:[#allocation10 + $0x260] sm:$0xf]
    %v1661 = vld [vmem:[#allocation10 + $0x264] sm:$0xf]
    %v1662 = vld [vmem:[#allocation10 + $0x268] sm:$0xf]
    %v1663 = vld [vmem:[#allocation10 + $0x26c] sm:$0xf]
    %v1664 = vld [vmem:[#allocation10 + $0x270] sm:$0xf]
    %v1665 = vld [vmem:[#allocation10 + $0x274] sm:$0xf]
    %v1666 = vld [vmem:[#allocation10 + $0x278] sm:$0xf]
    %v1667 = vld [vmem:[#allocation10 + $0x27c] sm:$0xf]
    %v1828 = vunpack.c.l.b16 %v1508
    %v1829 = vunpack.c.l.b16 %v1509
    %v1830 = vunpack.c.l.b16 %v1510
    %v1831 = vunpack.c.l.b16 %v1511
    %v1832 = vunpack.c.l.b16 %v1512
    %v1833 = vunpack.c.l.b16 %v1513
    %v1834 = vunpack.c.l.b16 %v1514
    %v1835 = vunpack.c.l.b16 %v1515
    %v1836 = vunpack.c.l.b16 %v1516
    %v1837 = vunpack.c.l.b16 %v1517
    %v1838 = vunpack.c.l.b16 %v1518
    %v1839 = vunpack.c.l.b16 %v1519
    %v1840 = vunpack.c.l.b16 %v1520
    %v1841 = vunpack.c.l.b16 %v1521
    %v1842 = vunpack.c.l.b16 %v1522
    %v1843 = vunpack.c.l.b16 %v1523
    %v1844 = vunpack.c.l.b16 %v1524
    %v1845 = vunpack.c.l.b16 %v1525
    %v1846 = vunpack.c.l.b16 %v1526
    %v1847 = vunpack.c.l.b16 %v1527
    %v1848 = vunpack.c.l.b16 %v1528
    %v1849 = vunpack.c.l.b16 %v1529
    %v1850 = vunpack.c.l.b16 %v1530
    %v1851 = vunpack.c.l.b16 %v1531
    %v1852 = vunpack.c.l.b16 %v1532
    %v1853 = vunpack.c.l.b16 %v1533
    %v1854 = vunpack.c.l.b16 %v1534
    %v1855 = vunpack.c.l.b16 %v1535
    %v1856 = vunpack.c.l.b16 %v1536
    %v1857 = vunpack.c.l.b16 %v1537
    %v1858 = vunpack.c.l.b16 %v1538
    %v1859 = vunpack.c.l.b16 %v1539
    %v1860 = vunpack.c.l.b16 %v1540
    %v1861 = vunpack.c.l.b16 %v1541
    %v1862 = vunpack.c.l.b16 %v1542
    %v1863 = vunpack.c.l.b16 %v1543
    %v1864 = vunpack.c.l.b16 %v1544
    %v1865 = vunpack.c.l.b16 %v1545
    %v1866 = vunpack.c.l.b16 %v1546
    %v1867 = vunpack.c.l.b16 %v1547
    %v1868 = vunpack.c.l.b16 %v1548
    %v1869 = vunpack.c.l.b16 %v1549
    %v1870 = vunpack.c.l.b16 %v1550
    %v1871 = vunpack.c.l.b16 %v1551
    %v1872 = vunpack.c.l.b16 %v1552
    %v1873 = vunpack.c.l.b16 %v1553
    %v1874 = vunpack.c.l.b16 %v1554
    %v1875 = vunpack.c.l.b16 %v1555
    %v1876 = vunpack.c.l.b16 %v1556
    %v1877 = vunpack.c.l.b16 %v1557
    %v1878 = vunpack.c.l.b16 %v1558
    %v1879 = vunpack.c.l.b16 %v1559
    %v1880 = vunpack.c.l.b16 %v1560
    %v1881 = vunpack.c.l.b16 %v1561
    %v1882 = vunpack.c.l.b16 %v1562
    %v1883 = vunpack.c.l.b16 %v1563
    %v1884 = vunpack.c.l.b16 %v1564
    %v1885 = vunpack.c.l.b16 %v1565
    %v1886 = vunpack.c.l.b16 %v1566
    %v1887 = vunpack.c.l.b16 %v1567
    %v1888 = vunpack.c.l.b16 %v1568
    %v1889 = vunpack.c.l.b16 %v1569
    %v1890 = vunpack.c.l.b16 %v1570
    %v1891 = vunpack.c.l.b16 %v1571
    %v1892 = vunpack.c.l.b16 %v1572
    %v1893 = vunpack.c.l.b16 %v1573
    %v1894 = vunpack.c.l.b16 %v1574
    %v1895 = vunpack.c.l.b16 %v1575
    %v1896 = vunpack.c.l.b16 %v1576
    %v1897 = vunpack.c.l.b16 %v1577
    %v1898 = vunpack.c.l.b16 %v1578
    %v1899 = vunpack.c.l.b16 %v1579
    %v1900 = vunpack.c.l.b16 %v1580
    %v1901 = vunpack.c.l.b16 %v1581
    %v1902 = vunpack.c.l.b16 %v1582
    %v1903 = vunpack.c.l.b16 %v1583
    %v1904 = vunpack.c.l.b16 %v1584
    %v1905 = vunpack.c.l.b16 %v1585
    %v1906 = vunpack.c.l.b16 %v1586
    %v1907 = vunpack.c.l.b16 %v1587
    %v1908 = vunpack.c.l.b16 %v1588
    %v1909 = vunpack.c.l.b16 %v1589
    %v1910 = vunpack.c.l.b16 %v1590
    %v1911 = vunpack.c.l.b16 %v1591
    %v1912 = vunpack.c.l.b16 %v1592
    %v1913 = vunpack.c.l.b16 %v1593
    %v1914 = vunpack.c.l.b16 %v1594
    %v1915 = vunpack.c.l.b16 %v1595
    %v1916 = vunpack.c.l.b16 %v1596
    %v1917 = vunpack.c.l.b16 %v1597
    %v1918 = vunpack.c.l.b16 %v1598
    %v1919 = vunpack.c.l.b16 %v1599
    %v1920 = vunpack.c.l.b16 %v1600
    %v1921 = vunpack.c.l.b16 %v1601
    %v1922 = vunpack.c.l.b16 %v1602
    %v1923 = vunpack.c.l.b16 %v1603
    %v1924 = vunpack.c.l.b16 %v1604
    %v1925 = vunpack.c.l.b16 %v1605
    %v1926 = vunpack.c.l.b16 %v1606
    %v1927 = vunpack.c.l.b16 %v1607
    %v1928 = vunpack.c.l.b16 %v1608
    %v1929 = vunpack.c.l.b16 %v1609
    %v1930 = vunpack.c.l.b16 %v1610
    %v1931 = vunpack.c.l.b16 %v1611
    %v1932 = vunpack.c.l.b16 %v1612
    %v1933 = vunpack.c.l.b16 %v1613
    %v1934 = vunpack.c.l.b16 %v1614
    %v1935 = vunpack.c.l.b16 %v1615
    %v1936 = vunpack.c.l.b16 %v1616
    %v1937 = vunpack.c.l.b16 %v1617
    %v1938 = vunpack.c.l.b16 %v1618
    %v1939 = vunpack.c.l.b16 %v1619
    %v1940 = vunpack.c.l.b16 %v1620
    %v1941 = vunpack.c.l.b16 %v1621
    %v1942 = vunpack.c.l.b16 %v1622
    %v1943 = vunpack.c.l.b16 %v1623
    %v1944 = vunpack.c.l.b16 %v1624
    %v1945 = vunpack.c.l.b16 %v1625
    %v1946 = vunpack.c.l.b16 %v1626
    %v1947 = vunpack.c.l.b16 %v1627
    %v1948 = vunpack.c.l.b16 %v1628
    %v1949 = vunpack.c.l.b16 %v1629
    %v1950 = vunpack.c.l.b16 %v1630
    %v1951 = vunpack.c.l.b16 %v1631
    %v1952 = vunpack.c.l.b16 %v1632
    %v1953 = vunpack.c.l.b16 %v1633
    %v1954 = vunpack.c.l.b16 %v1634
    %v1955 = vunpack.c.l.b16 %v1635
    %v1956 = vunpack.c.l.b16 %v1636
    %v1957 = vunpack.c.l.b16 %v1637
    %v1958 = vunpack.c.l.b16 %v1638
    %v1959 = vunpack.c.l.b16 %v1639
    %v1960 = vunpack.c.l.b16 %v1640
    %v1961 = vunpack.c.l.b16 %v1641
    %v1962 = vunpack.c.l.b16 %v1642
    %v1963 = vunpack.c.l.b16 %v1643
    %v1964 = vunpack.c.l.b16 %v1644
    %v1965 = vunpack.c.l.b16 %v1645
    %v1966 = vunpack.c.l.b16 %v1646
    %v1967 = vunpack.c.l.b16 %v1647
    %v1968 = vunpack.c.l.b16 %v1648
    %v1969 = vunpack.c.l.b16 %v1649
    %v1970 = vunpack.c.l.b16 %v1650
    %v1971 = vunpack.c.l.b16 %v1651
    %v1972 = vunpack.c.l.b16 %v1652
    %v1973 = vunpack.c.l.b16 %v1653
    %v1974 = vunpack.c.l.b16 %v1654
    %v1975 = vunpack.c.l.b16 %v1655
    %v1976 = vunpack.c.l.b16 %v1656
    %v1977 = vunpack.c.l.b16 %v1657
    %v1978 = vunpack.c.l.b16 %v1658
    %v1979 = vunpack.c.l.b16 %v1659
    %v1980 = vunpack.c.l.b16 %v1660
    %v1981 = vunpack.c.l.b16 %v1661
    %v1982 = vunpack.c.l.b16 %v1662
    %v1983 = vunpack.c.l.b16 %v1663
    %v1984 = vunpack.c.l.b16 %v1664
    %v1985 = vunpack.c.l.b16 %v1665
    %v1986 = vunpack.c.l.b16 %v1666
    %v1987 = vunpack.c.l.b16 %v1667
    %v1988 = vpack.c.b16 %v1829, %v1828
    %v1989 = vpack.c.b16 %v1831, %v1830
    %v1990 = vpack.c.b16 %v1833, %v1832
    %v1991 = vpack.c.b16 %v1835, %v1834
    %v1992 = vpack.c.b16 %v1837, %v1836
    %v1993 = vpack.c.b16 %v1839, %v1838
    %v1994 = vpack.c.b16 %v1841, %v1840
    %v1995 = vpack.c.b16 %v1843, %v1842
    %v1996 = vpack.c.b16 %v1845, %v1844
    %v1997 = vpack.c.b16 %v1847, %v1846
    %v1998 = vpack.c.b16 %v1849, %v1848
    %v1999 = vpack.c.b16 %v1851, %v1850
    %v2000 = vpack.c.b16 %v1853, %v1852
    %v2001 = vpack.c.b16 %v1855, %v1854
    %v2002 = vpack.c.b16 %v1857, %v1856
    %v2003 = vpack.c.b16 %v1859, %v1858
    %v2004 = vpack.c.b16 %v1861, %v1860
    %v2005 = vpack.c.b16 %v1863, %v1862
    %v2006 = vpack.c.b16 %v1865, %v1864
    %v2007 = vpack.c.b16 %v1867, %v1866
    %v2008 = vpack.c.b16 %v1869, %v1868
    %v2009 = vpack.c.b16 %v1871, %v1870
    %v2010 = vpack.c.b16 %v1873, %v1872
    %v2011 = vpack.c.b16 %v1875, %v1874
    %v2012 = vpack.c.b16 %v1877, %v1876
    %v2013 = vpack.c.b16 %v1879, %v1878
    %v2014 = vpack.c.b16 %v1881, %v1880
    %v2015 = vpack.c.b16 %v1883, %v1882
    %v2016 = vpack.c.b16 %v1885, %v1884
    %v2017 = vpack.c.b16 %v1887, %v1886
    %v2018 = vpack.c.b16 %v1889, %v1888
    %v2019 = vpack.c.b16 %v1891, %v1890
    %v2020 = vpack.c.b16 %v1893, %v1892
    %v2021 = vpack.c.b16 %v1895, %v1894
    %v2022 = vpack.c.b16 %v1897, %v1896
    %v2023 = vpack.c.b16 %v1899, %v1898
    %v2024 = vpack.c.b16 %v1901, %v1900
    %v2025 = vpack.c.b16 %v1903, %v1902
    %v2026 = vpack.c.b16 %v1905, %v1904
    %v2027 = vpack.c.b16 %v1907, %v1906
    %v2028 = vpack.c.b16 %v1909, %v1908
    %v2029 = vpack.c.b16 %v1911, %v1910
    %v2030 = vpack.c.b16 %v1913, %v1912
    %v2031 = vpack.c.b16 %v1915, %v1914
    %v2032 = vpack.c.b16 %v1917, %v1916
    %v2033 = vpack.c.b16 %v1919, %v1918
    %v2034 = vpack.c.b16 %v1921, %v1920
    %v2035 = vpack.c.b16 %v1923, %v1922
    %v2036 = vpack.c.b16 %v1925, %v1924
    %v2037 = vpack.c.b16 %v1927, %v1926
    %v2038 = vpack.c.b16 %v1929, %v1928
    %v2039 = vpack.c.b16 %v1931, %v1930
    %v2040 = vpack.c.b16 %v1933, %v1932
    %v2041 = vpack.c.b16 %v1935, %v1934
    %v2042 = vpack.c.b16 %v1937, %v1936
    %v2043 = vpack.c.b16 %v1939, %v1938
    %v2044 = vpack.c.b16 %v1941, %v1940
    %v2045 = vpack.c.b16 %v1943, %v1942
    %v2046 = vpack.c.b16 %v1945, %v1944
    %v2047 = vpack.c.b16 %v1947, %v1946
    %v2048 = vpack.c.b16 %v1949, %v1948
    %v2049 = vpack.c.b16 %v1951, %v1950
    %v2050 = vpack.c.b16 %v1953, %v1952
    %v2051 = vpack.c.b16 %v1955, %v1954
    %v2052 = vpack.c.b16 %v1957, %v1956
    %v2053 = vpack.c.b16 %v1959, %v1958
    %v2054 = vpack.c.b16 %v1961, %v1960
    %v2055 = vpack.c.b16 %v1963, %v1962
    %v2056 = vpack.c.b16 %v1965, %v1964
    %v2057 = vpack.c.b16 %v1967, %v1966
    %v2058 = vpack.c.b16 %v1969, %v1968
    %v2059 = vpack.c.b16 %v1971, %v1970
    %v2060 = vpack.c.b16 %v1973, %v1972
    %v2061 = vpack.c.b16 %v1975, %v1974
    %v2062 = vpack.c.b16 %v1977, %v1976
    %v2063 = vpack.c.b16 %v1979, %v1978
    %v2064 = vpack.c.b16 %v1981, %v1980
    %v2065 = vpack.c.b16 %v1983, %v1982
    %v2066 = vpack.c.b16 %v1985, %v1984
    %v2067 = vpack.c.b16 %v1987, %v1986
    %2148 = vmatpush.bf16.msra.mxu0 %v1995
    %2149 = vmatpush.bf16.msra.mxu0 %v1994
    %2150 = vmatpush.bf16.msra.mxu0 %v1993
    %2151 = vmatpush.bf16.msra.mxu0 %v1992
    %2152 = vmatpush.bf16.msra.mxu0 %v1991
    %2153 = vmatpush.bf16.msra.mxu0 %v1990
    %2154 = vmatpush.bf16.msra.mxu0 %v1989
    %2155 = vmatpush.bf16.msra.mxu0 %v1988
    %2156 = vmatmul.bf16.gmra.mxu0 %v1498
    %v2157 = vpop.f32.mrf.mxu0
    %v2158 = vadd.f32 0.0, %v2157
    %v2159 = vpop.f32.mrf.mxu0
    %2160 = vdwg.mxu0
    %2161 = vmatpush.bf16.msra.mxu0 %v2003
    %2162 = vmatpush.bf16.msra.mxu0 %v2002
    %2163 = vmatpush.bf16.msra.mxu0 %v2001
    %2164 = vmatpush.bf16.msra.mxu0 %v2000
    %2165 = vmatpush.bf16.msra.mxu0 %v1999
    %2166 = vmatpush.bf16.msra.mxu0 %v1998
    %2167 = vmatpush.bf16.msra.mxu0 %v1997
    %2168 = vmatpush.bf16.msra.mxu0 %v1996
    %2169 = vmatmul.bf16.gmra.mxu0 %v1499
    %v2170 = vpop.f32.mrf.mxu0
    %v2171 = vadd.f32 %v2158, %v2170
    %v2172 = vpop.f32.mrf.mxu0
    %2173 = vdwg.mxu0
    %2174 = vmatpush.bf16.msra.mxu0 %v2011
    %2175 = vmatpush.bf16.msra.mxu0 %v2010
    %2176 = vmatpush.bf16.msra.mxu0 %v2009
    %2177 = vmatpush.bf16.msra.mxu0 %v2008
    %2178 = vmatpush.bf16.msra.mxu0 %v2007
    %2179 = vmatpush.bf16.msra.mxu0 %v2006
    %2180 = vmatpush.bf16.msra.mxu0 %v2005
    %2181 = vmatpush.bf16.msra.mxu0 %v2004
    %2182 = vmatmul.bf16.gmra.mxu0 %v1500
    %v2183 = vpop.f32.mrf.mxu0
    %v2184 = vadd.f32 %v2171, %v2183
    %v2185 = vpop.f32.mrf.mxu0
    %2186 = vdwg.mxu0
    %2187 = vmatpush.bf16.msra.mxu0 %v2019
    %2188 = vmatpush.bf16.msra.mxu0 %v2018
    %2189 = vmatpush.bf16.msra.mxu0 %v2017
    %2190 = vmatpush.bf16.msra.mxu0 %v2016
    %2191 = vmatpush.bf16.msra.mxu0 %v2015
    %2192 = vmatpush.bf16.msra.mxu0 %v2014
    %2193 = vmatpush.bf16.msra.mxu0 %v2013
    %2194 = vmatpush.bf16.msra.mxu0 %v2012
    %2195 = vmatmul.bf16.gmra.mxu0 %v1501
    %v2196 = vpop.f32.mrf.mxu0
    %v2197 = vadd.f32 %v2184, %v2196
    %v2198 = vpop.f32.mrf.mxu0
    %2199 = vdwg.mxu0
    %2200 = vmatpush.bf16.msra.mxu0 %v2027
    %2201 = vmatpush.bf16.msra.mxu0 %v2026
    %2202 = vmatpush.bf16.msra.mxu0 %v2025
    %2203 = vmatpush.bf16.msra.mxu0 %v2024
    %2204 = vmatpush.bf16.msra.mxu0 %v2023
    %2205 = vmatpush.bf16.msra.mxu0 %v2022
    %2206 = vmatpush.bf16.msra.mxu0 %v2021
    %2207 = vmatpush.bf16.msra.mxu0 %v2020
    %2208 = vmatmul.bf16.gmra.mxu0 %v1502
    %v2209 = vpop.f32.mrf.mxu0
    %v2210 = vadd.f32 %v2197, %v2209
    %v2211 = vpop.f32.mrf.mxu0
    %2212 = vdwg.mxu0
    %2213 = vmatpush.bf16.msra.mxu0 %v2035
    %2214 = vmatpush.bf16.msra.mxu0 %v2034
    %2215 = vmatpush.bf16.msra.mxu0 %v2033
    %2216 = vmatpush.bf16.msra.mxu0 %v2032
    %2217 = vmatpush.bf16.msra.mxu0 %v2031
    %2218 = vmatpush.bf16.msra.mxu0 %v2030
    %2219 = vmatpush.bf16.msra.mxu0 %v2029
    %2220 = vmatpush.bf16.msra.mxu0 %v2028
    %2221 = vmatmul.bf16.gmra.mxu0 %v1503
    %v2222 = vpop.f32.mrf.mxu0
    %v2223 = vadd.f32 %v2210, %v2222
    %v2224 = vpop.f32.mrf.mxu0
    %2225 = vdwg.mxu0
    %2226 = vmatpush.bf16.msra.mxu0 %v2043
    %2227 = vmatpush.bf16.msra.mxu0 %v2042
    %2228 = vmatpush.bf16.msra.mxu0 %v2041
    %2229 = vmatpush.bf16.msra.mxu0 %v2040
    %2230 = vmatpush.bf16.msra.mxu0 %v2039
    %2231 = vmatpush.bf16.msra.mxu0 %v2038
    %2232 = vmatpush.bf16.msra.mxu0 %v2037
    %2233 = vmatpush.bf16.msra.mxu0 %v2036
    %2234 = vmatmul.bf16.gmra.mxu0 %v1504
    %v2235 = vpop.f32.mrf.mxu0
    %v2236 = vadd.f32 %v2223, %v2235
    %v2237 = vpop.f32.mrf.mxu0
    %2238 = vdwg.mxu0
    %2239 = vmatpush.bf16.msra.mxu0 %v2051
    %2240 = vmatpush.bf16.msra.mxu0 %v2050
    %2241 = vmatpush.bf16.msra.mxu0 %v2049
    %2242 = vmatpush.bf16.msra.mxu0 %v2048
    %2243 = vmatpush.bf16.msra.mxu0 %v2047
    %2244 = vmatpush.bf16.msra.mxu0 %v2046
    %2245 = vmatpush.bf16.msra.mxu0 %v2045
    %2246 = vmatpush.bf16.msra.mxu0 %v2044
    %2247 = vmatmul.bf16.gmra.mxu0 %v1505
    %v2248 = vpop.f32.mrf.mxu0
    %v2249 = vadd.f32 %v2236, %v2248
    %v2250 = vpop.f32.mrf.mxu0
    %2251 = vdwg.mxu0
    %2252 = vmatpush.bf16.msra.mxu0 %v2059
    %2253 = vmatpush.bf16.msra.mxu0 %v2058
    %2254 = vmatpush.bf16.msra.mxu0 %v2057
    %2255 = vmatpush.bf16.msra.mxu0 %v2056
    %2256 = vmatpush.bf16.msra.mxu0 %v2055
    %2257 = vmatpush.bf16.msra.mxu0 %v2054
    %2258 = vmatpush.bf16.msra.mxu0 %v2053
    %2259 = vmatpush.bf16.msra.mxu0 %v2052
    %2260 = vmatmul.bf16.gmra.mxu0 %v1506
    %v2261 = vpop.f32.mrf.mxu0
    %v2262 = vadd.f32 %v2249, %v2261
    %v2263 = vpop.f32.mrf.mxu0
    %2264 = vdwg.mxu0
    %2265 = vmatpush.bf16.msra.mxu0 %v2067
    %2266 = vmatpush.bf16.msra.mxu0 %v2066
    %2267 = vmatpush.bf16.msra.mxu0 %v2065
    %2268 = vmatpush.bf16.msra.mxu0 %v2064
    %2269 = vmatpush.bf16.msra.mxu0 %v2063
    %2270 = vmatpush.bf16.msra.mxu0 %v2062
    %2271 = vmatpush.bf16.msra.mxu0 %v2061
    %2272 = vmatpush.bf16.msra.mxu0 %v2060
    %2273 = vmatmul.bf16.gmra.mxu0 %v1507
    %v2274 = vpop.f32.mrf.mxu0
    %v2275 = vadd.f32 %v2262, %v2274
    %v2276 = vpop.f32.mrf.mxu0
    %2277 = vdwg.mxu0
    %vm2278 = vcmp.ge.f32.partialorder %v2275, 0.0
    %v2279 = vsel %vm2278, 1.0, -1.0
    %v2280 = vand.u32 2147483647, %v2275
    %v2281 = vrsqrt.pop %v2280
    %v2282 = vmul.f32 %v2281, %v2280
    %v2283 = vmul.f32 %v2282, %v2281
    %v2284 = vmul.f32 0.5, %v2283
    %v2285 = vsub.f32 1.5, %v2284
    %v2286 = vmul.f32 %v2281, %v2285
    %v2287 = vmul.f32 %v2280, %v2286
    %vm2288 = vcmp.eq.f32.partialorder %v2280, inf
    %v2289 = vsel %vm2288, %v2280, %v2287
    %vm2290 = vcmp.eq.f32.partialorder %v2280, 0.0
    %v2291 = vand.u32 %v2280, 2147483648
    %v2292 = vsel %vm2290, %v2291, %v2289
    %v2293 = vmul.f32 %v2279, %v2292
    %v2294 = vmul.f32 %v2293, %v2293
    %2295 = vadd.xlane.f32.xlu0 %v2294
    %v2296 = vpop.xlane.xlu0 %2295
    %v2297 = vmax.f32 %v2296, 1e-24
    %v2298 = vrsqrt.pop %v2297
    %v2299 = vmul.f32 %v2298, %v2297
    %v2300 = vmul.f32 %v2299, %v2298
    %v2301 = vmul.f32 0.5, %v2300
    %v2302 = vsub.f32 1.5, %v2301
    %v2303 = vmul.f32 %v2298, %v2302
    %vm2304 = vweird.f32 %v2297
    %vm2305 = vweird.f32 %v2298
    %vm2306 = vmor %vm2304, %vm2305
    %v2307 = vsel %vm2306, %v2298, %v2303
    %v2308 = vmul.f32 %v2293, %v2307
    %v2309 = vpack.c.bf16 %v2308, %v2308
    %v2310 = vld [vmem:[%s8] sm:$0xf]
    %v2311 = vld [vmem:[%s8 + $0x4] sm:$0xf]
    %v2312 = vld [vmem:[%s8 + $0x8] sm:$0xf]
    %v2313 = vld [vmem:[%s8 + $0xc] sm:$0xf]
    %v2314 = vld [vmem:[%s8 + $0x10] sm:$0xf]
    %v2315 = vld [vmem:[%s8 + $0x14] sm:$0xf]
    %v2316 = vld [vmem:[%s8 + $0x18] sm:$0xf]
    %v2317 = vld [vmem:[%s8 + $0x1c] sm:$0xf]
    %v2318 = vld [vmem:[%s8 + $0x20] sm:$0xf]
    %v2319 = vld [vmem:[%s8 + $0x24] sm:$0xf]
    %v2320 = vld [vmem:[%s8 + $0x28] sm:$0xf]
    %v2321 = vld [vmem:[%s8 + $0x2c] sm:$0xf]
    %v2322 = vld [vmem:[%s8 + $0x30] sm:$0xf]
    %v2323 = vld [vmem:[%s8 + $0x34] sm:$0xf]
    %v2324 = vld [vmem:[%s8 + $0x38] sm:$0xf]
    %v2325 = vld [vmem:[%s8 + $0x3c] sm:$0xf]
    %v2326 = vld [vmem:[%s9] sm:$0x1]
    %v2328 = vperm.slane %v2326, 0
    %v2346 = vunpack.c.l.b16 %v2310
    %v2347 = vunpack.c.l.b16 %v2311
    %v2348 = vunpack.c.l.b16 %v2312
    %v2349 = vunpack.c.l.b16 %v2313
    %v2350 = vunpack.c.l.b16 %v2314
    %v2351 = vunpack.c.l.b16 %v2315
    %v2352 = vunpack.c.l.b16 %v2316
    %v2353 = vunpack.c.l.b16 %v2317
    %v2354 = vunpack.c.l.b16 %v2318
    %v2355 = vunpack.c.l.b16 %v2319
    %v2356 = vunpack.c.l.b16 %v2320
    %v2357 = vunpack.c.l.b16 %v2321
    %v2358 = vunpack.c.l.b16 %v2322
    %v2359 = vunpack.c.l.b16 %v2323
    %v2360 = vunpack.c.l.b16 %v2324
    %v2361 = vunpack.c.l.b16 %v2325
    %v2362 = vpack.c.b16 %v2347, %v2346
    %v2363 = vpack.c.b16 %v2349, %v2348
    %v2364 = vpack.c.b16 %v2351, %v2350
    %v2365 = vpack.c.b16 %v2353, %v2352
    %v2366 = vpack.c.b16 %v2355, %v2354
    %v2367 = vpack.c.b16 %v2357, %v2356
    %v2368 = vpack.c.b16 %v2359, %v2358
    %v2369 = vpack.c.b16 %v2361, %v2360
    %2378 = vmatpush.bf16.msra.mxu0 %v2369
    %2379 = vmatpush.bf16.msra.mxu0 %v2368
    %2380 = vmatpush.bf16.msra.mxu0 %v2367
    %2381 = vmatpush.bf16.msra.mxu0 %v2366
    %2382 = vmatpush.bf16.msra.mxu0 %v2365
    %2383 = vmatpush.bf16.msra.mxu0 %v2364
    %2384 = vmatpush.bf16.msra.mxu0 %v2363
    %2385 = vmatpush.bf16.msra.mxu0 %v2362
    %2386 = vmatmul.bf16.gmra.mxu0 %v2309
    %v2387 = vpop.f32.mrf.mxu0
    %v2388 = vadd.f32 %v2328, %v2387
    %v2389 = vpop.f32.mrf.mxu0
    %2390 = vdwg.mxu0
    %2391 = vmax.xlane.f32.xlu0 %v2388
    %v2392 = vpop.xlane.xlu0 %2391
    %v2393 = vsub.f32 %v2388, %v2392
    %v2394 = vmul.f32 %v2393, 1.442695
    %v2395 = vpow.pop %v2394
    %2396 = vadd.xlane.f32.xlu0 %v2395
    %v2397 = vpop.xlane.xlu0 %2396
    %v2398 = vrcp.pop %v2397
    %v2399 = vmul.f32 %v2395, %v2398
    %2400 = vst [vmem:[#allocation11] sm:$0xff] %v2399
    // Predicated region
    $region62: #{tpu_custom_call.1} parent=1 // pred_check
      _
    $region63: #{tpu_custom_call.1} parent=1 // pred_check_branch
      %2402 = sbr.rel (0) target = $region65
    $region64: #{tpu_custom_call.1} parent=1 // pred_region
      %2404 = vsyncadd [#allocation4], 0
      %s2406 = sshll.u32 [#allocation11], 4
      %s2407 = int_to_ptr.vmem [resolvable:$true] %s2406
      %s2408 = sshll.u32 %s10, 4
      %s2409 = int_to_ptr.hbm [resolvable:$true] %s2408
      %2411 = dma.vmem_to_hbm [thread:$0]  %s2407, 128, %s2409, [#allocation4]
    $region65: #{tpu_custom_call.1} parent=1 // pred_fallthru
      _
    // Predicated region
    $region66: #{tpu_custom_call.1} parent=1 // pred_check
      _
    $region67: #{tpu_custom_call.1} parent=1 // pred_check_branch
      %2413 = sbr.rel (0) target = $region69
    $region68: #{tpu_custom_call.1} parent=1 // pred_region
      %2415 = dma.done [#allocation4], 128
    $region69: #{tpu_custom_call.1} parent=1 // pred_fallthru
      _
    %2416 = vsyncpa [#allocation3], 1
    %2417 = vsyncpa [#allocation6], 1
    %2418 = vsyncpa [#allocation9], 1
    %2419 = vsyncpa [#allocation4], 1

</llo_original>
